<compile_context>
chip_gen: v7x
topology: tpu7x:2x2x1
jax: 0.10.0
libtpu: 0.0.40
codegen_flags: <defaults>
</compile_context>

<pallas_src>
import jax
import jax.numpy as jnp
from jax.experimental import pallas as pl
from jax.experimental.pallas import tpu as pltpu


def _round_up(x, m):
    return ((x + m - 1) // m) * m


def textcnn_kernel(x_ref, wconv_ref, bias_ref, wfc_ref, out_ref):
    """Whole TextCNN forward for one batch block.

    x_ref    : (S*Bb, Ep) bf16, time-major within the block (row = t*Bb + b)
    wconv_ref: (12*Ep, Fp) bf16, tap-stacked conv weights (k=3 taps, k=4, k=5)
    bias_ref : (8, P)     f32, rows 0..2 = conv biases (k=3,4,5) in [:Fp],
                               row 3 = fc bias in [:Cp]
    wfc_ref  : (3*Fp, Cp) bf16, fc weight^T in Fp row blocks (k=3,4,5)
    out_ref  : (Bb, Cp)   f32 logits slab (lane-dense, unmasked store)
    """
    SBb, Ep = x_ref.shape
    Bb, Cp = out_ref.shape
    S = SBb // Bb
    Fp = wconv_ref.shape[1]

    # Load the block once; it stays resident across every tap matmul.
    x = x_ref[...]                                   # (S*Bb, Ep) bf16

    logits = bias_ref[3:4, 0:Cp]                     # fc bias (1, Cp), f32

    tap = 0
    for ki, k in enumerate((3, 4, 5)):
        L = S - k + 1

        # Conv as per-tap MXU matmuls accumulated in f32: only Fp columns live.
        acc = None
        for j in range(k):
            lhs = x[j * Bb:(j + L) * Bb, :]                          # (L*Bb, Ep)
            rhs = wconv_ref[(tap + j) * Ep:(tap + j + 1) * Ep, :]    # (Ep, Fp)
            term = jnp.dot(lhs, rhs, preferred_element_type=jnp.float32)
            acc = term if acc is None else acc + term                # (L*Bb, Fp)
        tap += k

        # Max-pool over the L time positions (pairwise tree, (8,128)-aligned slices).
        parts = [acc[t * Bb:(t + 1) * Bb, :] for t in range(L)]
        while len(parts) > 1:
            nxt = [jnp.maximum(parts[i], parts[i + 1])
                   for i in range(0, len(parts) - 1, 2)]
            if len(parts) % 2:
                nxt.append(parts[-1])
            parts = nxt
        pooled = parts[0]                                            # (Bb, Fp) f32

        # Bias + ReLU after the pool (exact reorder: per-filter bias, monotone ReLU).
        pooled = jnp.maximum(pooled + bias_ref[ki:ki + 1, 0:Fp], 0.0)

        # fc contribution for this kernel size (bf16 matmul, f32 accumulate);
        # summing the three Fp-blocks avoids an in-kernel concat.
        logits = logits + jnp.dot(pooled.astype(wfc_ref.dtype),
                                  wfc_ref[ki * Fp:(ki + 1) * Fp, :],
                                  preferred_element_type=jnp.float32)

    # TODO(synk): nn.Dropout(0.5) is identity in eval mode; training-mode
    # stochastic dropout is not reproduced here.
    out_ref[...] = logits


def pack_params(params):
    """One-time weight packing (call at init, NOT per forward)."""
    emb = params["embedding"]
    V, E = emb.shape
    F = params["conv3_w"].shape[0]
    C = params["fc_b"].shape[0]
    Ep = _round_up(E, 8)               # sublane-aligned contraction blocks
    Fp = _round_up(F, 128)             # lane-aligned filters
    Cp = _round_up(C, 128)             # lane-dense logits
    P = max(Fp, Cp)

    # Embedding table padded + cast once -> gathers come out bf16 directly.
    emb_p = jnp.zeros((V, Ep), jnp.bfloat16).at[:, :E].set(
        emb.astype(jnp.bfloat16))

    # Conv weights: taps stacked along rows -> (12*Ep, Fp), bf16.
    rows = []
    for k in (3, 4, 5):
        w = params[f"conv{k}_w"].astype(jnp.float32)                 # (F, k, E)
        for j in range(k):
            blk = jnp.zeros((Ep, Fp), jnp.float32).at[:E, :F].set(w[:, j, :].T)
            rows.append(blk)
    wconv = jnp.concatenate(rows, axis=0).astype(jnp.bfloat16)

    # Single bias slab: rows 0..2 = conv biases, row 3 = fc bias (1 DMA, not 4).
    bias = jnp.zeros((8, P), jnp.float32)
    for ki, k in enumerate((3, 4, 5)):
        bias = bias.at[ki, :F].set(params[f"conv{k}_b"].astype(jnp.float32))
    bias = bias.at[3, :C].set(params["fc_b"].astype(jnp.float32))

    # fc weight^T, Fp row blocks ordered k=3,4,5, zero-padded, bf16.
    fc_w = params["fc_w"].astype(jnp.float32)                        # (C, 3*F)
    wfc = jnp.zeros((3 * Fp, Cp), jnp.float32)
    for ki in range(3):
        wfc = wfc.at[ki * Fp:ki * Fp + F, :C].set(
            fc_w[:, ki * F:(ki + 1) * F].T)
    wfc = wfc.astype(jnp.bfloat16)

    return {"emb": emb_p, "wconv": wconv, "bias": bias, "wfc": wfc}


def textcnn_forward(input_ids, packed, num_classes, attention_mask=None):
    """input_ids: (B, S) int32 token ids. Returns logits (B, num_classes).

    attention_mask accepted for signature parity with the PyTorch module but
    (as in the PyTorch forward) unused.
    """
    del attention_mask
    emb = packed["emb"]                 # (V, Ep)      bf16
    wconv = packed["wconv"]             # (12*Ep, Fp)  bf16
    bias = packed["bias"]               # (8, P)       f32
    wfc = packed["wfc"]                 # (3*Fp, Cp)   bf16
    Ep = emb.shape[1]
    Cp = wfc.shape[1]

    B, S = input_ids.shape
    B8 = _round_up(B, 8)
    Bb = min(B8, 64)                    # batch rows per grid block (sublane-aligned)
    nb = pl.cdiv(B8, Bb)
    Bp = nb * Bb

    # Embedding gather (glue) directly in bf16, laid out time-major per block:
    # x3[i, t*Bb + b, :] = embedding(token of batch i*Bb+b at time t).
    # TODO(synk): at production vocab/seq sizes, gather embedding rows inside the
    # kernel from an HBM-resident table (pl.ANY + DMA) instead of materializing x3.
    ids_p = jnp.zeros((Bp, S), input_ids.dtype).at[:B].set(input_ids)
    x = emb[ids_p]                                          # (Bp, S, Ep) bf16
    x = x.reshape(nb, Bb, S, Ep).transpose(0, 2, 1, 3)      # (nb, S, Bb, Ep)
    x3 = x.reshape(nb, S * Bb, Ep)

    out = pl.pallas_call(
        textcnn_kernel,
        out_shape=jax.ShapeDtypeStruct((nb, Bb, Cp), jnp.float32),
        grid=(nb,),
        in_specs=[
            pl.BlockSpec((None, S * Bb, Ep), lambda i: (i, 0, 0)),
            pl.BlockSpec(wconv.shape, lambda i: (0, 0)),
            pl.BlockSpec(bias.shape, lambda i: (0, 0)),
            pl.BlockSpec(wfc.shape, lambda i: (0, 0)),
        ],
        out_specs=pl.BlockSpec((None, Bb, Cp), lambda i: (i, 0, 0)),
        compiler_params=pltpu.CompilerParams(
            dimension_semantics=("parallel",),
            vmem_limit_bytes=32 * 1024 * 1024,
        ),
    )(x3, wconv, bias, wfc)

    return out.reshape(nb * Bb, Cp)[:B, :num_classes]


def make_params(key, vocab_size, embedding_dim, num_filters=100, num_classes=10):
    keys = jax.random.split(key, 9)
    s = 0.1
    p = {
        "embedding": s * jax.random.normal(
            keys[0], (vocab_size, embedding_dim), jnp.float32),
    }
    for i, k in enumerate((3, 4, 5)):
        p[f"conv{k}_w"] = s * jax.random.normal(
            keys[1 + 2 * i], (num_filters, k, embedding_dim), jnp.float32)
        p[f"conv{k}_b"] = s * jax.random.normal(
            keys[2 + 2 * i], (num_filters,), jnp.float32)
    p["fc_w"] = s * jax.random.normal(
        keys[7], (num_classes, 3 * num_filters), jnp.float32)
    p["fc_b"] = s * jax.random.normal(keys[8], (num_classes,), jnp.float32)
    return p


def reference_forward(input_ids, params):
    """Pure-JAX f32 reference matching the PyTorch TextCNN forward (eval mode)."""
    x = params["embedding"][input_ids].astype(jnp.float32)   # (B, S, E)
    B, S, E = x.shape
    feats = []
    for k in (3, 4, 5):
        w = params[f"conv{k}_w"].astype(jnp.float32)          # (F, k, E)
        b = params[f"conv{k}_b"].astype(jnp.float32)          # (F,)
        F_ = w.shape[0]
        L = S - k + 1
        windows = jnp.stack(
            [x[:, t:t + k, :].reshape(B, k * E) for t in range(L)], axis=1)
        conv = windows @ w.reshape(F_, k * E).T + b           # (B, L, F)
        conv = jax.nn.relu(conv)
        feats.append(conv.max(axis=1))                        # (B, F)
    feat = jnp.concatenate(feats, axis=1)                     # (B, 3F)
    return feat @ params["fc_w"].T + params["fc_b"]           # (B, C)


if __name__ == "__main__":
    vocab_size, embedding_dim, num_filters, num_classes = 100, 32, 100, 10
    batch, seq = 2, 8

    key = jax.random.PRNGKey(0)
    pkey, ikey = jax.random.split(key)
    params = make_params(pkey, vocab_size, embedding_dim, num_filters, num_classes)
    packed = pack_params(params)                      # one-time packing (init)
    input_ids = jax.random.randint(ikey, (batch, seq), 0, vocab_size, jnp.int32)
    attention_mask = jnp.ones((batch, seq), jnp.int32)   # unused (parity only)

    fwd = jax.jit(textcnn_forward, static_argnames=("num_classes",))
    logits = fwd(input_ids, packed, num_classes=num_classes,
                 attention_mask=attention_mask)
    logits = jax.block_until_ready(logits)

    ref = reference_forward(input_ids, params)
    assert logits.shape == (batch, num_classes)
    err = float(jnp.max(jnp.abs(logits - ref)))
    # bf16 MXU path vs f32 reference -> loosened tolerance.
    assert jnp.allclose(logits, ref, atol=2e-2, rtol=2e-2), err

    print("KERNEL_OK")
</pallas_src>

<mosaic_0001>
module attributes {stable_mosaic.version = 11 : i64} {
  func.func @textcnn_kernel(%arg0: i32, %arg1: memref<1x64x32xbf16, #tpu.memory_space<vmem>>, %arg2: memref<384x128xbf16, #tpu.memory_space<vmem>>, %arg3: memref<8x128xf32, #tpu.memory_space<vmem>>, %arg4: memref<384x128xbf16, #tpu.memory_space<vmem>>, %arg5: memref<1x8x128xf32, #tpu.memory_space<vmem>>) attributes {dimension_semantics = [#tpu.dimension_semantics<parallel>], iteration_bounds = array<i64: 1>, scalar_prefetch = 0 : i64, scratch_operands = 0 : i64, tpu.core_type = #tpu.core_type<tc>, window_params = [{transform_indices = @transform_0, window_bounds = array<i64: 1, 64, 32>}, {pipeline_mode = #tpu.pipeline_mode<synchronous>, transform_indices = @transform_1, window_bounds = array<i64: 384, 128>}, {pipeline_mode = #tpu.pipeline_mode<synchronous>, transform_indices = @transform_2, window_bounds = array<i64: 8, 128>}, {pipeline_mode = #tpu.pipeline_mode<synchronous>, transform_indices = @transform_3, window_bounds = array<i64: 384, 128>}, {transform_indices = @transform_4, window_bounds = array<i64: 1, 8, 128>}]} {
    %c0 = arith.constant 0 : index
    %c0_0 = arith.constant 0 : index
    %c0_1 = arith.constant 0 : index
    %0 = vector.load %arg1[%c0, %c0_0, %c0_1] : memref<1x64x32xbf16, #tpu.memory_space<vmem>>, vector<1x64x32xbf16>
    %1 = vector.shape_cast %0 : vector<1x64x32xbf16> to vector<64x32xbf16>
    %c3 = arith.constant 3 : index
    %c0_2 = arith.constant 0 : index
    %2 = vector.load %arg3[%c3, %c0_2] : memref<8x128xf32, #tpu.memory_space<vmem>>, vector<1x128xf32>
    %3 = vector.extract_strided_slice %1 {offsets = [0, 0], sizes = [48, 32], strides = [1, 1]} : vector<64x32xbf16> to vector<48x32xbf16>
    %c0_3 = arith.constant 0 : index
    %c0_4 = arith.constant 0 : index
    %4 = vector.load %arg2[%c0_3, %c0_4] : memref<384x128xbf16, #tpu.memory_space<vmem>>, vector<32x128xbf16>
    %cst = arith.constant dense<0.000000e+00> : vector<48x128xf32>
    %5 = tpu.matmul %3, %4, %cst {dimension_numbers = #tpu.dot_dimension_numbers<[1], [0], [0], [1], [0, 0, 1, 1], [], []>} : vector<48x32xbf16>, vector<32x128xbf16>, vector<48x128xf32> -> vector<48x128xf32>
    %6 = vector.extract_strided_slice %1 {offsets = [8, 0], sizes = [48, 32], strides = [1, 1]} : vector<64x32xbf16> to vector<48x32xbf16>
    %c32 = arith.constant 32 : index
    %c0_5 = arith.constant 0 : index
    %7 = vector.load %arg2[%c32, %c0_5] : memref<384x128xbf16, #tpu.memory_space<vmem>>, vector<32x128xbf16>
    %cst_6 = arith.constant dense<0.000000e+00> : vector<48x128xf32>
    %8 = tpu.matmul %6, %7, %cst_6 {dimension_numbers = #tpu.dot_dimension_numbers<[1], [0], [0], [1], [0, 0, 1, 1], [], []>} : vector<48x32xbf16>, vector<32x128xbf16>, vector<48x128xf32> -> vector<48x128xf32>
    %9 = arith.addf %5, %8 : vector<48x128xf32>
    %10 = vector.extract_strided_slice %1 {offsets = [16, 0], sizes = [48, 32], strides = [1, 1]} : vector<64x32xbf16> to vector<48x32xbf16>
    %c64 = arith.constant 64 : index
    %c0_7 = arith.constant 0 : index
    %11 = vector.load %arg2[%c64, %c0_7] : memref<384x128xbf16, #tpu.memory_space<vmem>>, vector<32x128xbf16>
    %cst_8 = arith.constant dense<0.000000e+00> : vector<48x128xf32>
    %12 = tpu.matmul %10, %11, %cst_8 {dimension_numbers = #tpu.dot_dimension_numbers<[1], [0], [0], [1], [0, 0, 1, 1], [], []>} : vector<48x32xbf16>, vector<32x128xbf16>, vector<48x128xf32> -> vector<48x128xf32>
    %13 = arith.addf %9, %12 : vector<48x128xf32>
    %14 = vector.extract_strided_slice %13 {offsets = [0, 0], sizes = [8, 128], strides = [1, 1]} : vector<48x128xf32> to vector<8x128xf32>
    %15 = vector.extract_strided_slice %13 {offsets = [8, 0], sizes = [8, 128], strides = [1, 1]} : vector<48x128xf32> to vector<8x128xf32>
    %16 = vector.extract_strided_slice %13 {offsets = [16, 0], sizes = [8, 128], strides = [1, 1]} : vector<48x128xf32> to vector<8x128xf32>
    %17 = vector.extract_strided_slice %13 {offsets = [24, 0], sizes = [8, 128], strides = [1, 1]} : vector<48x128xf32> to vector<8x128xf32>
    %18 = vector.extract_strided_slice %13 {offsets = [32, 0], sizes = [8, 128], strides = [1, 1]} : vector<48x128xf32> to vector<8x128xf32>
    %19 = vector.extract_strided_slice %13 {offsets = [40, 0], sizes = [8, 128], strides = [1, 1]} : vector<48x128xf32> to vector<8x128xf32>
    %20 = arith.maximumf %14, %15 : vector<8x128xf32>
    %21 = arith.maximumf %16, %17 : vector<8x128xf32>
    %22 = arith.maximumf %18, %19 : vector<8x128xf32>
    %23 = arith.maximumf %20, %21 : vector<8x128xf32>
    %24 = arith.maximumf %23, %22 : vector<8x128xf32>
    %c0_9 = arith.constant 0 : index
    %c0_10 = arith.constant 0 : index
    %25 = vector.load %arg3[%c0_9, %c0_10] : memref<8x128xf32, #tpu.memory_space<vmem>>, vector<1x128xf32>
    %26 = vector.broadcast %25 : vector<1x128xf32> to vector<8x128xf32>
    %27 = arith.addf %24, %26 : vector<8x128xf32>
    %cst_11 = arith.constant 0.000000e+00 : f32
    %28 = vector.broadcast %cst_11 : f32 to vector<8x128xf32>
    %29 = arith.maximumf %27, %28 : vector<8x128xf32>
    %30 = arith.truncf %29 : vector<8x128xf32> to vector<8x128xbf16>
    %c0_12 = arith.constant 0 : index
    %c0_13 = arith.constant 0 : index
    %31 = vector.load %arg4[%c0_12, %c0_13] : memref<384x128xbf16, #tpu.memory_space<vmem>>, vector<128x128xbf16>
    %cst_14 = arith.constant dense<0.000000e+00> : vector<8x128xf32>
    %32 = tpu.matmul %30, %31, %cst_14 {dimension_numbers = #tpu.dot_dimension_numbers<[1], [0], [0], [1], [0, 0, 1, 1], [], []>} : vector<8x128xbf16>, vector<128x128xbf16>, vector<8x128xf32> -> vector<8x128xf32>
    %33 = vector.broadcast %2 : vector<1x128xf32> to vector<8x128xf32>
    %34 = arith.addf %33, %32 : vector<8x128xf32>
    %35 = vector.extract_strided_slice %1 {offsets = [0, 0], sizes = [40, 32], strides = [1, 1]} : vector<64x32xbf16> to vector<40x32xbf16>
    %c96 = arith.constant 96 : index
    %c0_15 = arith.constant 0 : index
    %36 = vector.load %arg2[%c96, %c0_15] : memref<384x128xbf16, #tpu.memory_space<vmem>>, vector<32x128xbf16>
    %cst_16 = arith.constant dense<0.000000e+00> : vector<40x128xf32>
    %37 = tpu.matmul %35, %36, %cst_16 {dimension_numbers = #tpu.dot_dimension_numbers<[1], [0], [0], [1], [0, 0, 1, 1], [], []>} : vector<40x32xbf16>, vector<32x128xbf16>, vector<40x128xf32> -> vector<40x128xf32>
    %38 = vector.extract_strided_slice %1 {offsets = [8, 0], sizes = [40, 32], strides = [1, 1]} : vector<64x32xbf16> to vector<40x32xbf16>
    %c128 = arith.constant 128 : index
    %c0_17 = arith.constant 0 : index
    %39 = vector.load %arg2[%c128, %c0_17] : memref<384x128xbf16, #tpu.memory_space<vmem>>, vector<32x128xbf16>
    %cst_18 = arith.constant dense<0.000000e+00> : vector<40x128xf32>
    %40 = tpu.matmul %38, %39, %cst_18 {dimension_numbers = #tpu.dot_dimension_numbers<[1], [0], [0], [1], [0, 0, 1, 1], [], []>} : vector<40x32xbf16>, vector<32x128xbf16>, vector<40x128xf32> -> vector<40x128xf32>
    %41 = arith.addf %37, %40 : vector<40x128xf32>
    %42 = vector.extract_strided_slice %1 {offsets = [16, 0], sizes = [40, 32], strides = [1, 1]} : vector<64x32xbf16> to vector<40x32xbf16>
    %c160 = arith.constant 160 : index
    %c0_19 = arith.constant 0 : index
    %43 = vector.load %arg2[%c160, %c0_19] : memref<384x128xbf16, #tpu.memory_space<vmem>>, vector<32x128xbf16>
    %cst_20 = arith.constant dense<0.000000e+00> : vector<40x128xf32>
    %44 = tpu.matmul %42, %43, %cst_20 {dimension_numbers = #tpu.dot_dimension_numbers<[1], [0], [0], [1], [0, 0, 1, 1], [], []>} : vector<40x32xbf16>, vector<32x128xbf16>, vector<40x128xf32> -> vector<40x128xf32>
    %45 = arith.addf %41, %44 : vector<40x128xf32>
    %46 = vector.extract_strided_slice %1 {offsets = [24, 0], sizes = [40, 32], strides = [1, 1]} : vector<64x32xbf16> to vector<40x32xbf16>
    %c192 = arith.constant 192 : index
    %c0_21 = arith.constant 0 : index
    %47 = vector.load %arg2[%c192, %c0_21] : memref<384x128xbf16, #tpu.memory_space<vmem>>, vector<32x128xbf16>
    %cst_22 = arith.constant dense<0.000000e+00> : vector<40x128xf32>
    %48 = tpu.matmul %46, %47, %cst_22 {dimension_numbers = #tpu.dot_dimension_numbers<[1], [0], [0], [1], [0, 0, 1, 1], [], []>} : vector<40x32xbf16>, vector<32x128xbf16>, vector<40x128xf32> -> vector<40x128xf32>
    %49 = arith.addf %45, %48 : vector<40x128xf32>
    %50 = vector.extract_strided_slice %49 {offsets = [0, 0], sizes = [8, 128], strides = [1, 1]} : vector<40x128xf32> to vector<8x128xf32>
    %51 = vector.extract_strided_slice %49 {offsets = [8, 0], sizes = [8, 128], strides = [1, 1]} : vector<40x128xf32> to vector<8x128xf32>
    %52 = vector.extract_strided_slice %49 {offsets = [16, 0], sizes = [8, 128], strides = [1, 1]} : vector<40x128xf32> to vector<8x128xf32>
    %53 = vector.extract_strided_slice %49 {offsets = [24, 0], sizes = [8, 128], strides = [1, 1]} : vector<40x128xf32> to vector<8x128xf32>
    %54 = vector.extract_strided_slice %49 {offsets = [32, 0], sizes = [8, 128], strides = [1, 1]} : vector<40x128xf32> to vector<8x128xf32>
    %55 = arith.maximumf %50, %51 : vector<8x128xf32>
    %56 = arith.maximumf %52, %53 : vector<8x128xf32>
    %57 = arith.maximumf %55, %56 : vector<8x128xf32>
    %58 = arith.maximumf %57, %54 : vector<8x128xf32>
    %c1 = arith.constant 1 : index
    %c0_23 = arith.constant 0 : index
    %59 = vector.load %arg3[%c1, %c0_23] : memref<8x128xf32, #tpu.memory_space<vmem>>, vector<1x128xf32>
    %60 = vector.broadcast %59 : vector<1x128xf32> to vector<8x128xf32>
    %61 = arith.addf %58, %60 : vector<8x128xf32>
    %cst_24 = arith.constant 0.000000e+00 : f32
    %62 = vector.broadcast %cst_24 : f32 to vector<8x128xf32>
    %63 = arith.maximumf %61, %62 : vector<8x128xf32>
    %64 = arith.truncf %63 : vector<8x128xf32> to vector<8x128xbf16>
    %c128_25 = arith.constant 128 : index
    %c0_26 = arith.constant 0 : index
    %65 = vector.load %arg4[%c128_25, %c0_26] : memref<384x128xbf16, #tpu.memory_space<vmem>>, vector<128x128xbf16>
    %cst_27 = arith.constant dense<0.000000e+00> : vector<8x128xf32>
    %66 = tpu.matmul %64, %65, %cst_27 {dimension_numbers = #tpu.dot_dimension_numbers<[1], [0], [0], [1], [0, 0, 1, 1], [], []>} : vector<8x128xbf16>, vector<128x128xbf16>, vector<8x128xf32> -> vector<8x128xf32>
    %67 = arith.addf %34, %66 : vector<8x128xf32>
    %68 = vector.extract_strided_slice %1 {offsets = [0, 0], sizes = [32, 32], strides = [1, 1]} : vector<64x32xbf16> to vector<32x32xbf16>
    %c224 = arith.constant 224 : index
    %c0_28 = arith.constant 0 : index
    %69 = vector.load %arg2[%c224, %c0_28] : memref<384x128xbf16, #tpu.memory_space<vmem>>, vector<32x128xbf16>
    %cst_29 = arith.constant dense<0.000000e+00> : vector<32x128xf32>
    %70 = tpu.matmul %68, %69, %cst_29 {dimension_numbers = #tpu.dot_dimension_numbers<[1], [0], [0], [1], [0, 0, 1, 1], [], []>} : vector<32x32xbf16>, vector<32x128xbf16>, vector<32x128xf32> -> vector<32x128xf32>
    %71 = vector.extract_strided_slice %1 {offsets = [8, 0], sizes = [32, 32], strides = [1, 1]} : vector<64x32xbf16> to vector<32x32xbf16>
    %c256 = arith.constant 256 : index
    %c0_30 = arith.constant 0 : index
    %72 = vector.load %arg2[%c256, %c0_30] : memref<384x128xbf16, #tpu.memory_space<vmem>>, vector<32x128xbf16>
    %cst_31 = arith.constant dense<0.000000e+00> : vector<32x128xf32>
    %73 = tpu.matmul %71, %72, %cst_31 {dimension_numbers = #tpu.dot_dimension_numbers<[1], [0], [0], [1], [0, 0, 1, 1], [], []>} : vector<32x32xbf16>, vector<32x128xbf16>, vector<32x128xf32> -> vector<32x128xf32>
    %74 = arith.addf %70, %73 : vector<32x128xf32>
    %75 = vector.extract_strided_slice %1 {offsets = [16, 0], sizes = [32, 32], strides = [1, 1]} : vector<64x32xbf16> to vector<32x32xbf16>
    %c288 = arith.constant 288 : index
    %c0_32 = arith.constant 0 : index
    %76 = vector.load %arg2[%c288, %c0_32] : memref<384x128xbf16, #tpu.memory_space<vmem>>, vector<32x128xbf16>
    %cst_33 = arith.constant dense<0.000000e+00> : vector<32x128xf32>
    %77 = tpu.matmul %75, %76, %cst_33 {dimension_numbers = #tpu.dot_dimension_numbers<[1], [0], [0], [1], [0, 0, 1, 1], [], []>} : vector<32x32xbf16>, vector<32x128xbf16>, vector<32x128xf32> -> vector<32x128xf32>
    %78 = arith.addf %74, %77 : vector<32x128xf32>
    %79 = vector.extract_strided_slice %1 {offsets = [24, 0], sizes = [32, 32], strides = [1, 1]} : vector<64x32xbf16> to vector<32x32xbf16>
    %c320 = arith.constant 320 : index
    %c0_34 = arith.constant 0 : index
    %80 = vector.load %arg2[%c320, %c0_34] : memref<384x128xbf16, #tpu.memory_space<vmem>>, vector<32x128xbf16>
    %cst_35 = arith.constant dense<0.000000e+00> : vector<32x128xf32>
    %81 = tpu.matmul %79, %80, %cst_35 {dimension_numbers = #tpu.dot_dimension_numbers<[1], [0], [0], [1], [0, 0, 1, 1], [], []>} : vector<32x32xbf16>, vector<32x128xbf16>, vector<32x128xf32> -> vector<32x128xf32>
    %82 = arith.addf %78, %81 : vector<32x128xf32>
    %83 = vector.extract_strided_slice %1 {offsets = [32, 0], sizes = [32, 32], strides = [1, 1]} : vector<64x32xbf16> to vector<32x32xbf16>
    %c352 = arith.constant 352 : index
    %c0_36 = arith.constant 0 : index
    %84 = vector.load %arg2[%c352, %c0_36] : memref<384x128xbf16, #tpu.memory_space<vmem>>, vector<32x128xbf16>
    %cst_37 = arith.constant dense<0.000000e+00> : vector<32x128xf32>
    %85 = tpu.matmul %83, %84, %cst_37 {dimension_numbers = #tpu.dot_dimension_numbers<[1], [0], [0], [1], [0, 0, 1, 1], [], []>} : vector<32x32xbf16>, vector<32x128xbf16>, vector<32x128xf32> -> vector<32x128xf32>
    %86 = arith.addf %82, %85 : vector<32x128xf32>
    %87 = vector.extract_strided_slice %86 {offsets = [0, 0], sizes = [8, 128], strides = [1, 1]} : vector<32x128xf32> to vector<8x128xf32>
    %88 = vector.extract_strided_slice %86 {offsets = [8, 0], sizes = [8, 128], strides = [1, 1]} : vector<32x128xf32> to vector<8x128xf32>
    %89 = vector.extract_strided_slice %86 {offsets = [16, 0], sizes = [8, 128], strides = [1, 1]} : vector<32x128xf32> to vector<8x128xf32>
    %90 = vector.extract_strided_slice %86 {offsets = [24, 0], sizes = [8, 128], strides = [1, 1]} : vector<32x128xf32> to vector<8x128xf32>
    %91 = arith.maximumf %87, %88 : vector<8x128xf32>
    %92 = arith.maximumf %89, %90 : vector<8x128xf32>
    %93 = arith.maximumf %91, %92 : vector<8x128xf32>
    %c2 = arith.constant 2 : index
    %c0_38 = arith.constant 0 : index
    %94 = vector.load %arg3[%c2, %c0_38] : memref<8x128xf32, #tpu.memory_space<vmem>>, vector<1x128xf32>
    %95 = vector.broadcast %94 : vector<1x128xf32> to vector<8x128xf32>
    %96 = arith.addf %93, %95 : vector<8x128xf32>
    %cst_39 = arith.constant 0.000000e+00 : f32
    %97 = vector.broadcast %cst_39 : f32 to vector<8x128xf32>
    %98 = arith.maximumf %96, %97 : vector<8x128xf32>
    %99 = arith.truncf %98 : vector<8x128xf32> to vector<8x128xbf16>
    %c256_40 = arith.constant 256 : index
    %c0_41 = arith.constant 0 : index
    %100 = vector.load %arg4[%c256_40, %c0_41] : memref<384x128xbf16, #tpu.memory_space<vmem>>, vector<128x128xbf16>
    %cst_42 = arith.constant dense<0.000000e+00> : vector<8x128xf32>
    %101 = tpu.matmul %99, %100, %cst_42 {dimension_numbers = #tpu.dot_dimension_numbers<[1], [0], [0], [1], [0, 0, 1, 1], [], []>} : vector<8x128xbf16>, vector<128x128xbf16>, vector<8x128xf32> -> vector<8x128xf32>
    %102 = arith.addf %67, %101 : vector<8x128xf32>
    %c0_43 = arith.constant 0 : index
    %c0_44 = arith.constant 0 : index
    %c0_45 = arith.constant 0 : index
    %103 = vector.load %arg5[%c0_43, %c0_44, %c0_45] : memref<1x8x128xf32, #tpu.memory_space<vmem>>, vector<1x8x128xf32>
    %104 = vector.shape_cast %103 : vector<1x8x128xf32> to vector<8x128xf32>
    %105 = vector.shape_cast %102 : vector<8x128xf32> to vector<1x8x128xf32>
    tpu.vector_store %arg5[%c0_43, %c0_44, %c0_45], %105 {strides = array<i32>} : memref<1x8x128xf32, #tpu.memory_space<vmem>>, vector<1x8x128xf32>,
    return
  }
  func.func @transform_0(%arg0: i32) -> (i32, i32, i32) {
    %c0_i32 = arith.constant 0 : i32
    %c0_i32_0 = arith.constant 0 : i32
    %c0_i32_1 = arith.constant 0 : i32
    return %arg0, %c0_i32, %c0_i32_0 : i32, i32, i32
  }
  func.func @transform_1(%arg0: i32) -> (i32, i32) {
    %c0_i32 = arith.constant 0 : i32
    %c0_i32_0 = arith.constant 0 : i32
    %c0_i32_1 = arith.constant 0 : i32
    return %c0_i32, %c0_i32_0 : i32, i32
  }
  func.func @transform_2(%arg0: i32) -> (i32, i32) {
    %c0_i32 = arith.constant 0 : i32
    %c0_i32_0 = arith.constant 0 : i32
    %c0_i32_1 = arith.constant 0 : i32
    return %c0_i32, %c0_i32_0 : i32, i32
  }
  func.func @transform_3(%arg0: i32) -> (i32, i32) {
    %c0_i32 = arith.constant 0 : i32
    %c0_i32_0 = arith.constant 0 : i32
    %c0_i32_1 = arith.constant 0 : i32
    return %c0_i32, %c0_i32_0 : i32, i32
  }
  func.func @transform_4(%arg0: i32) -> (i32, i32, i32) {
    %c0_i32 = arith.constant 0 : i32
    %c0_i32_0 = arith.constant 0 : i32
    %c0_i32_1 = arith.constant 0 : i32
    return %arg0, %c0_i32, %c0_i32_0 : i32, i32, i32
  }
}

</mosaic_0001>

<llo_original>
// kernel: textcnn_forward.1
$region0: #{textcnn_forward.1}
  #allocation0 [shape = 'u32[]', space=smem, size = 0x4, offset = 0x4, fixed_abs, tag = 'smem constant byte address 0x4 - core index']
  #allocation1 [shape = 'u32[144,128]{1,0:T(1,128)}', space=vmem, size = 0x12000, scoped, tag = 'internal scratch']
  %s0 = inlined_call_operand.vmem [shape: bf16[1,64,32], index: 0, kind: input, shape index: {}]
  %s1 = inlined_call_operand.vmem [shape: bf16[384,128], index: 1, kind: input, shape index: {}]
  %s2 = inlined_call_operand.vmem [shape: f32[8,128], index: 2, kind: input, shape index: {}]
  %s3 = inlined_call_operand.vmem [shape: bf16[384,128], index: 3, kind: input, shape index: {}]
  %s4 = inlined_call_operand.vmem [shape: f32[1,8,128], index: 4, kind: output, shape index: {}]
  %s5 = sld [smem:[#allocation0]]
  $region26: #{textcnn_forward.1} parent=0
    _
  %s7 = ssub.s32 1, %s5
  %s8 = scalar_select 0, %s7, %s5
  // Predicated region
  $region2: #{textcnn_forward.1} parent=0 // pred_check
    _
  $region3: #{textcnn_forward.1} parent=0 // pred_check_branch
    %10 = sbr.rel (0) target = $region5
  $region4: #{textcnn_forward.1} parent=0 // pred_region
    _
  $region5: #{textcnn_forward.1} parent=0 // pred_fallthru
    _
  // Predicated region
  $region6: #{textcnn_forward.1} parent=0 // pred_check
    _
  $region7: #{textcnn_forward.1} parent=0 // pred_check_branch
    %12 = sbr.rel (0) target = $region9
  $region8: #{textcnn_forward.1} parent=0 // pred_region
    _
  $region9: #{textcnn_forward.1} parent=0 // pred_fallthru
    _
  // Predicated region
  $region10: #{textcnn_forward.1} parent=0 // pred_check
    _
  $region11: #{textcnn_forward.1} parent=0 // pred_check_branch
    %14 = sbr.rel (0) target = $region13
  $region12: #{textcnn_forward.1} parent=0 // pred_region
    _
  $region13: #{textcnn_forward.1} parent=0 // pred_fallthru
    _
  // Predicated region
  $region14: #{textcnn_forward.1} parent=0 // pred_check
    _
  $region15: #{textcnn_forward.1} parent=0 // pred_check_branch
    %16 = sbr.rel (0) target = $region17
  $region16: #{textcnn_forward.1} parent=0 // pred_region
    _
  $region17: #{textcnn_forward.1} parent=0 // pred_fallthru
    _
  %v18 = vld [vmem:[%s0] sm:$0xf]
  %v19 = vld [vmem:[%s0 + $0x4] sm:$0xf]
  %v20 = vld [vmem:[%s0 + $0x8] sm:$0xf]
  %v21 = vld [vmem:[%s0 + $0xc] sm:$0xf]
  %v22 = vld [vmem:[%s0 + $0x10] sm:$0xf]
  %v23 = vld [vmem:[%s0 + $0x14] sm:$0xf]
  %v24 = vld [vmem:[%s0 + $0x18] sm:$0xf]
  %v25 = vld [vmem:[%s0 + $0x1c] sm:$0xf]
  %v26 = vld [vmem:[%s2 + $0x3] sm:$0x1]
  %v27 = vld [vmem:[%s1] sm:$0xf]
  %v28 = vld [vmem:[%s1 + $0x4] sm:$0xf]
  %v29 = vld [vmem:[%s1 + $0x8] sm:$0xf]
  %v30 = vld [vmem:[%s1 + $0xc] sm:$0xf]
  %v31 = vld [vmem:[%s1 + $0x10] sm:$0xf]
  %v32 = vld [vmem:[%s1 + $0x14] sm:$0xf]
  %v33 = vld [vmem:[%s1 + $0x18] sm:$0xf]
  %v34 = vld [vmem:[%s1 + $0x1c] sm:$0xf]
  %v41 = vunpack.c.l.b16 %v19
  %v42 = vunpack.c.l.b16 %v20
  %v43 = vunpack.c.l.b16 %v21
  %v44 = vunpack.c.l.b16 %v22
  %v45 = vunpack.c.l.b16 %v23
  %v46 = vunpack.c.l.b16 %v24
  %v47 = vpack.c.b16 %v42, %v41
  %v48 = vpack.c.b16 %v44, %v43
  %v49 = vpack.c.b16 %v46, %v45
  %v54 = vunpack.c.l.b16 %v31
  %v55 = vunpack.c.l.b16 %v32
  %v56 = vunpack.c.l.b16 %v33
  %v57 = vunpack.c.l.b16 %v34
  %v58 = vpack.c.b16 %v55, %v54
  %v59 = vpack.c.b16 %v57, %v56
  %vm62 = vcmask 261120
  %v64 = vsel %vm62, %v47, 0
  %v67 = vsel %vm62, %v48, 0
  %v70 = vsel %vm62, %v49, 0
  %72 = vmatprep.subr.bf16.mxu0 0
  %73 = vmatpush1.bf16.msra.mxu0 %v58
  %74 = vmatprep.subr.bf16.mxu0 0
  %75 = vmatpush1.bf16.msra.mxu0 %v59
  %76 = vmatprep.subr.bf16.mxu0 0
  %77 = vmatpush1.bf16.msra.mxu0 0
  %78 = vmatprep.subr.bf16.mxu0 0
  %79 = vmatpush1.bf16.msra.mxu0 0
  %80 = vmatprep.subr.bf16.mxu0 0
  %81 = vmatpush1.bf16.msra.mxu0 0
  %82 = vmatprep.subr.bf16.mxu0 0
  %83 = vmatpush1.bf16.msra.mxu0 0
  %84 = vmatprep.subr.bf16.mxu0 0
  %85 = vmatpush1.bf16.msra.mxu0 0
  %86 = vmatprep.subr.bf16.mxu0 0
  %87 = vmatpush1.bf16.msra.mxu0 0
  %88 = vmatprep.subr.bf16.mxu0 0
  %89 = vmatpush1.bf16.msra.mxu0 0
  %90 = vmatprep.subr.bf16.mxu0 0
  %91 = vmatpush1.bf16.msra.mxu0 0
  %92 = vmatprep.subr.bf16.mxu0 0
  %93 = vmatpush1.bf16.msra.mxu0 0
  %94 = vmatprep.subr.bf16.mxu0 0
  %95 = vmatpush1.bf16.msra.mxu0 0
  %96 = vmatprep.subr.bf16.mxu0 0
  %97 = vmatpush1.bf16.msra.mxu0 0
  %98 = vmatprep.subr.bf16.mxu0 0
  %99 = vmatpush1.bf16.msra.mxu0 0
  %100 = vmatprep.subr.bf16.mxu0 0
  %101 = vmatpush1.bf16.msra.mxu0 0
  %102 = vmatprep.subr.bf16.mxu0 0
  %103 = vmatpush1.bf16.msra.mxu0 0
  %104 = vmatprep.mubr.bf16.mxu0 0
  %105 = vmatmul.mubr.bf16.gmra.mrb[0].mxu0 %v64
  %v106 = vpop.f32.mrb[0].mxu0
  %v107 = vadd.f32 0.0, %v106
  %v108 = vpop.f32.mrb[0].mxu0
  %v109 = vpop.f32.mrb[0].mxu0
  %v110 = vadd.f32 0.0, %v109
  %v111 = vpop.f32.mrb[0].mxu0
  %112 = vmatprep.mubr.bf16.mxu0 0
  %113 = vmatmul.mubr.bf16.gmra.mrb[0].mxu0 %v67
  %v114 = vpop.f32.mrb[0].mxu0
  %v115 = vadd.f32 0.0, %v114
  %v116 = vpop.f32.mrb[0].mxu0
  %v117 = vpop.f32.mrb[0].mxu0
  %v118 = vadd.f32 0.0, %v117
  %v119 = vpop.f32.mrb[0].mxu0
  %120 = vmatprep.mubr.bf16.mxu0 0
  %121 = vmatmul.mubr.bf16.gmra.mrb[0].mxu0 %v70
  %v122 = vpop.f32.mrb[0].mxu0
  %v123 = vadd.f32 0.0, %v122
  %v124 = vpop.f32.mrb[0].mxu0
  %v125 = vpop.f32.mrb[0].mxu0
  %v126 = vadd.f32 0.0, %v125
  %v127 = vpop.f32.mrb[0].mxu0
  %128 = vdwg.mxu0
  %v130 = vunpack.c.l.b16 %v18
  %v131 = vpack.c.b16 %v41, %v130
  %v132 = vpack.c.b16 %v43, %v42
  %v133 = vpack.c.b16 %v45, %v44
  %v138 = vunpack.c.l.b16 %v27
  %v139 = vunpack.c.l.b16 %v28
  %v140 = vunpack.c.l.b16 %v29
  %v141 = vunpack.c.l.b16 %v30
  %v142 = vpack.c.b16 %v139, %v138
  %v143 = vpack.c.b16 %v141, %v140
  %v147 = vsel %vm62, %v131, 0
  %v150 = vsel %vm62, %v132, 0
  %v153 = vsel %vm62, %v133, 0
  %155 = vmatprep.subr.bf16.mxu0 0
  %156 = vmatpush1.bf16.msra.mxu0 %v142
  %157 = vmatprep.subr.bf16.mxu0 0
  %158 = vmatpush1.bf16.msra.mxu0 %v143
  %159 = vmatprep.subr.bf16.mxu0 0
  %160 = vmatpush1.bf16.msra.mxu0 0
  %161 = vmatprep.subr.bf16.mxu0 0
  %162 = vmatpush1.bf16.msra.mxu0 0
  %163 = vmatprep.subr.bf16.mxu0 0
  %164 = vmatpush1.bf16.msra.mxu0 0
  %165 = vmatprep.subr.bf16.mxu0 0
  %166 = vmatpush1.bf16.msra.mxu0 0
  %167 = vmatprep.subr.bf16.mxu0 0
  %168 = vmatpush1.bf16.msra.mxu0 0
  %169 = vmatprep.subr.bf16.mxu0 0
  %170 = vmatpush1.bf16.msra.mxu0 0
  %171 = vmatprep.subr.bf16.mxu0 0
  %172 = vmatpush1.bf16.msra.mxu0 0
  %173 = vmatprep.subr.bf16.mxu0 0
  %174 = vmatpush1.bf16.msra.mxu0 0
  %175 = vmatprep.subr.bf16.mxu0 0
  %176 = vmatpush1.bf16.msra.mxu0 0
  %177 = vmatprep.subr.bf16.mxu0 0
  %178 = vmatpush1.bf16.msra.mxu0 0
  %179 = vmatprep.subr.bf16.mxu0 0
  %180 = vmatpush1.bf16.msra.mxu0 0
  %181 = vmatprep.subr.bf16.mxu0 0
  %182 = vmatpush1.bf16.msra.mxu0 0
  %183 = vmatprep.subr.bf16.mxu0 0
  %184 = vmatpush1.bf16.msra.mxu0 0
  %185 = vmatprep.subr.bf16.mxu0 0
  %186 = vmatpush1.bf16.msra.mxu0 0
  %187 = vmatprep.mubr.bf16.mxu0 0
  %188 = vmatmul.mubr.bf16.gmra.mrb[0].mxu0 %v147
  %v189 = vpop.f32.mrb[0].mxu0
  %v190 = vadd.f32 %v107, %v189
  %v191 = vpop.f32.mrb[0].mxu0
  %v192 = vpop.f32.mrb[0].mxu0
  %v193 = vadd.f32 %v110, %v192
  %v194 = vpop.f32.mrb[0].mxu0
  %195 = vmatprep.mubr.bf16.mxu0 0
  %196 = vmatmul.mubr.bf16.gmra.mrb[0].mxu0 %v150
  %v197 = vpop.f32.mrb[0].mxu0
  %v198 = vadd.f32 %v115, %v197
  %v199 = vpop.f32.mrb[0].mxu0
  %v200 = vpop.f32.mrb[0].mxu0
  %v201 = vadd.f32 %v118, %v200
  %v202 = vpop.f32.mrb[0].mxu0
  %203 = vmatprep.mubr.bf16.mxu0 0
  %204 = vmatmul.mubr.bf16.gmra.mrb[0].mxu0 %v153
  %v205 = vpop.f32.mrb[0].mxu0
  %v206 = vadd.f32 %v123, %v205
  %v207 = vpop.f32.mrb[0].mxu0
  %v208 = vpop.f32.mrb[0].mxu0
  %v209 = vadd.f32 %v126, %v208
  %v210 = vpop.f32.mrb[0].mxu0
  %211 = vdwg.mxu0
  %v212 = vld [vmem:[%s1 + $0x20] sm:$0xf]
  %v213 = vld [vmem:[%s1 + $0x24] sm:$0xf]
  %v214 = vld [vmem:[%s1 + $0x28] sm:$0xf]
  %v215 = vld [vmem:[%s1 + $0x2c] sm:$0xf]
  %v217 = vunpack.c.l.b16 %v25
  %v218 = vpack.c.b16 %v217, %v46
  %v223 = vunpack.c.l.b16 %v212
  %v224 = vunpack.c.l.b16 %v213
  %v225 = vunpack.c.l.b16 %v214
  %v226 = vunpack.c.l.b16 %v215
  %v227 = vpack.c.b16 %v224, %v223
  %v228 = vpack.c.b16 %v226, %v225
  %v232 = vsel %vm62, %v218, 0
  %234 = vmatprep.subr.bf16.mxu0 0
  %235 = vmatpush1.bf16.msra.mxu0 %v227
  %236 = vmatprep.subr.bf16.mxu0 0
  %237 = vmatpush1.bf16.msra.mxu0 %v228
  %238 = vmatprep.subr.bf16.mxu0 0
  %239 = vmatpush1.bf16.msra.mxu0 0
  %240 = vmatprep.subr.bf16.mxu0 0
  %241 = vmatpush1.bf16.msra.mxu0 0
  %242 = vmatprep.subr.bf16.mxu0 0
  %243 = vmatpush1.bf16.msra.mxu0 0
  %244 = vmatprep.subr.bf16.mxu0 0
  %245 = vmatpush1.bf16.msra.mxu0 0
  %246 = vmatprep.subr.bf16.mxu0 0
  %247 = vmatpush1.bf16.msra.mxu0 0
  %248 = vmatprep.subr.bf16.mxu0 0
  %249 = vmatpush1.bf16.msra.mxu0 0
  %250 = vmatprep.subr.bf16.mxu0 0
  %251 = vmatpush1.bf16.msra.mxu0 0
  %252 = vmatprep.subr.bf16.mxu0 0
  %253 = vmatpush1.bf16.msra.mxu0 0
  %254 = vmatprep.subr.bf16.mxu0 0
  %255 = vmatpush1.bf16.msra.mxu0 0
  %256 = vmatprep.subr.bf16.mxu0 0
  %257 = vmatpush1.bf16.msra.mxu0 0
  %258 = vmatprep.subr.bf16.mxu0 0
  %259 = vmatpush1.bf16.msra.mxu0 0
  %260 = vmatprep.subr.bf16.mxu0 0
  %261 = vmatpush1.bf16.msra.mxu0 0
  %262 = vmatprep.subr.bf16.mxu0 0
  %263 = vmatpush1.bf16.msra.mxu0 0
  %264 = vmatprep.subr.bf16.mxu0 0
  %265 = vmatpush1.bf16.msra.mxu0 0
  %266 = vmatprep.mubr.bf16.mxu0 0
  %267 = vmatmul.mubr.bf16.gmra.mrb[0].mxu0 %v150
  %v268 = vpop.f32.mrb[0].mxu0
  %v269 = vadd.f32 0.0, %v268
  %v270 = vpop.f32.mrb[0].mxu0
  %v271 = vpop.f32.mrb[0].mxu0
  %v272 = vadd.f32 0.0, %v271
  %v273 = vpop.f32.mrb[0].mxu0
  %274 = vmatprep.mubr.bf16.mxu0 0
  %275 = vmatmul.mubr.bf16.gmra.mrb[0].mxu0 %v153
  %v276 = vpop.f32.mrb[0].mxu0
  %v277 = vadd.f32 0.0, %v276
  %v278 = vpop.f32.mrb[0].mxu0
  %v279 = vpop.f32.mrb[0].mxu0
  %v280 = vadd.f32 0.0, %v279
  %v281 = vpop.f32.mrb[0].mxu0
  %282 = vmatprep.mubr.bf16.mxu0 0
  %283 = vmatmul.mubr.bf16.gmra.mrb[0].mxu0 %v232
  %v284 = vpop.f32.mrb[0].mxu0
  %v285 = vadd.f32 0.0, %v284
  %v286 = vpop.f32.mrb[0].mxu0
  %v287 = vpop.f32.mrb[0].mxu0
  %v288 = vadd.f32 0.0, %v287
  %v289 = vpop.f32.mrb[0].mxu0
  %290 = vdwg.mxu0
  %v291 = vadd.f32 %v190, %v269
  %v292 = vadd.f32 %v193, %v272
  %v293 = vadd.f32 %v198, %v277
  %v294 = vadd.f32 %v201, %v280
  %v295 = vadd.f32 %v206, %v285
  %v296 = vadd.f32 %v209, %v288
  %v297 = vmax.f32 %v291, %v292
  %v298 = vmax.f32 %v293, %v294
  %v299 = vmax.f32 %v295, %v296
  %v300 = vmax.f32 %v297, %v298
  %v301 = vmax.f32 %v300, %v299
  %v302 = vld [vmem:[%s2] sm:$0x1]
  %v303 = vlaneseq
  %v304 = vshrl.u32 %v303, 7
  %v305 = vsub.s32 0, %v304
  %v306 = vrot.slane %v302, %v305
  %v307 = vadd.f32 %v301, %v306
  %v308 = vmax.f32 %v307, 0.0
  %v309 = vpack.c.bf16 %v308, %v308
  %v310 = vld [vmem:[%s3] sm:$0xf]
  %v311 = vld [vmem:[%s3 + $0x4] sm:$0xf]
  %v312 = vld [vmem:[%s3 + $0x8] sm:$0xf]
  %v313 = vld [vmem:[%s3 + $0xc] sm:$0xf]
  %v314 = vld [vmem:[%s3 + $0x10] sm:$0xf]
  %v315 = vld [vmem:[%s3 + $0x14] sm:$0xf]
  %v316 = vld [vmem:[%s3 + $0x18] sm:$0xf]
  %v317 = vld [vmem:[%s3 + $0x1c] sm:$0xf]
  %v318 = vld [vmem:[%s3 + $0x20] sm:$0xf]
  %v319 = vld [vmem:[%s3 + $0x24] sm:$0xf]
  %v320 = vld [vmem:[%s3 + $0x28] sm:$0xf]
  %v321 = vld [vmem:[%s3 + $0x2c] sm:$0xf]
  %v322 = vld [vmem:[%s3 + $0x30] sm:$0xf]
  %v323 = vld [vmem:[%s3 + $0x34] sm:$0xf]
  %v324 = vld [vmem:[%s3 + $0x38] sm:$0xf]
  %v325 = vld [vmem:[%s3 + $0x3c] sm:$0xf]
  %v342 = vunpack.c.l.b16 %v310
  %v343 = vunpack.c.l.b16 %v311
  %v344 = vunpack.c.l.b16 %v312
  %v345 = vunpack.c.l.b16 %v313
  %v346 = vunpack.c.l.b16 %v314
  %v347 = vunpack.c.l.b16 %v315
  %v348 = vunpack.c.l.b16 %v316
  %v349 = vunpack.c.l.b16 %v317
  %v350 = vunpack.c.l.b16 %v318
  %v351 = vunpack.c.l.b16 %v319
  %v352 = vunpack.c.l.b16 %v320
  %v353 = vunpack.c.l.b16 %v321
  %v354 = vunpack.c.l.b16 %v322
  %v355 = vunpack.c.l.b16 %v323
  %v356 = vunpack.c.l.b16 %v324
  %v357 = vunpack.c.l.b16 %v325
  %v358 = vpack.c.b16 %v343, %v342
  %v359 = vpack.c.b16 %v345, %v344
  %v360 = vpack.c.b16 %v347, %v346
  %v361 = vpack.c.b16 %v349, %v348
  %v362 = vpack.c.b16 %v351, %v350
  %v363 = vpack.c.b16 %v353, %v352
  %v364 = vpack.c.b16 %v355, %v354
  %v365 = vpack.c.b16 %v357, %v356
  %374 = vmatprep.subr.bf16.mxu0 0
  %375 = vmatpush1.bf16.msra.mxu0 %v358
  %376 = vmatprep.subr.bf16.mxu0 0
  %377 = vmatpush1.bf16.msra.mxu0 %v359
  %378 = vmatprep.subr.bf16.mxu0 0
  %379 = vmatpush1.bf16.msra.mxu0 %v360
  %380 = vmatprep.subr.bf16.mxu0 0
  %381 = vmatpush1.bf16.msra.mxu0 %v361
  %382 = vmatprep.subr.bf16.mxu0 0
  %383 = vmatpush1.bf16.msra.mxu0 %v362
  %384 = vmatprep.subr.bf16.mxu0 0
  %385 = vmatpush1.bf16.msra.mxu0 %v363
  %386 = vmatprep.subr.bf16.mxu0 0
  %387 = vmatpush1.bf16.msra.mxu0 %v364
  %388 = vmatprep.subr.bf16.mxu0 0
  %389 = vmatpush1.bf16.msra.mxu0 %v365
  %390 = vmatprep.subr.bf16.mxu0 0
  %391 = vmatpush1.bf16.msra.mxu0 0
  %392 = vmatprep.subr.bf16.mxu0 0
  %393 = vmatpush1.bf16.msra.mxu0 0
  %394 = vmatprep.subr.bf16.mxu0 0
  %395 = vmatpush1.bf16.msra.mxu0 0
  %396 = vmatprep.subr.bf16.mxu0 0
  %397 = vmatpush1.bf16.msra.mxu0 0
  %398 = vmatprep.subr.bf16.mxu0 0
  %399 = vmatpush1.bf16.msra.mxu0 0
  %400 = vmatprep.subr.bf16.mxu0 0
  %401 = vmatpush1.bf16.msra.mxu0 0
  %402 = vmatprep.subr.bf16.mxu0 0
  %403 = vmatpush1.bf16.msra.mxu0 0
  %404 = vmatprep.subr.bf16.mxu0 0
  %405 = vmatpush1.bf16.msra.mxu0 0
  %406 = vmatprep.mubr.bf16.mxu0 0
  %407 = vmatmul.mubr.bf16.gmra.mrb[0].mxu0 %v309
  %v408 = vpop.f32.mrb[0].mxu0
  %v409 = vadd.f32 0.0, %v408
  %v410 = vpop.f32.mrb[0].mxu0
  %v411 = vpop.f32.mrb[0].mxu0
  %v412 = vpop.f32.mrb[0].mxu0
  %413 = vdwg.mxu0
  %v414 = vlaneseq
  %v415 = vshrl.u32 %v414, 7
  %v416 = vsub.s32 0, %v415
  %v417 = vrot.slane %v26, %v416
  %v418 = vadd.f32 %v417, %v409
  %v419 = vld [vmem:[%s1 + $0x30] sm:$0xf]
  %v420 = vld [vmem:[%s1 + $0x34] sm:$0xf]
  %v421 = vld [vmem:[%s1 + $0x38] sm:$0xf]
  %v422 = vld [vmem:[%s1 + $0x3c] sm:$0xf]
  %v423 = vld [vmem:[%s1 + $0x40] sm:$0xf]
  %v424 = vld [vmem:[%s1 + $0x44] sm:$0xf]
  %v425 = vld [vmem:[%s1 + $0x48] sm:$0xf]
  %v426 = vld [vmem:[%s1 + $0x4c] sm:$0xf]
  %v427 = vpack.c.b16 %v45, %v45
  %v432 = vunpack.c.l.b16 %v423
  %v433 = vunpack.c.l.b16 %v424
  %v434 = vunpack.c.l.b16 %v425
  %v435 = vunpack.c.l.b16 %v426
  %v436 = vpack.c.b16 %v433, %v432
  %v437 = vpack.c.b16 %v435, %v434
  %v441 = vsel %vm62, %v427, 0
  %443 = vmatprep.subr.bf16.mxu0 0
  %444 = vmatpush1.bf16.msra.mxu0 %v436
  %445 = vmatprep.subr.bf16.mxu0 0
  %446 = vmatpush1.bf16.msra.mxu0 %v437
  %447 = vmatprep.subr.bf16.mxu0 0
  %448 = vmatpush1.bf16.msra.mxu0 0
  %449 = vmatprep.subr.bf16.mxu0 0
  %450 = vmatpush1.bf16.msra.mxu0 0
  %451 = vmatprep.subr.bf16.mxu0 0
  %452 = vmatpush1.bf16.msra.mxu0 0
  %453 = vmatprep.subr.bf16.mxu0 0
  %454 = vmatpush1.bf16.msra.mxu0 0
  %455 = vmatprep.subr.bf16.mxu0 0
  %456 = vmatpush1.bf16.msra.mxu0 0
  %457 = vmatprep.subr.bf16.mxu0 0
  %458 = vmatpush1.bf16.msra.mxu0 0
  %459 = vmatprep.subr.bf16.mxu0 0
  %460 = vmatpush1.bf16.msra.mxu0 0
  %461 = vmatprep.subr.bf16.mxu0 0
  %462 = vmatpush1.bf16.msra.mxu0 0
  %463 = vmatprep.subr.bf16.mxu0 0
  %464 = vmatpush1.bf16.msra.mxu0 0
  %465 = vmatprep.subr.bf16.mxu0 0
  %466 = vmatpush1.bf16.msra.mxu0 0
  %467 = vmatprep.subr.bf16.mxu0 0
  %468 = vmatpush1.bf16.msra.mxu0 0
  %469 = vmatprep.subr.bf16.mxu0 0
  %470 = vmatpush1.bf16.msra.mxu0 0
  %471 = vmatprep.subr.bf16.mxu0 0
  %472 = vmatpush1.bf16.msra.mxu0 0
  %473 = vmatprep.subr.bf16.mxu0 0
  %474 = vmatpush1.bf16.msra.mxu0 0
  %475 = vmatprep.mubr.bf16.mxu0 0
  %476 = vmatmul.mubr.bf16.gmra.mrb[0].mxu0 %v64
  %v477 = vpop.f32.mrb[0].mxu0
  %v478 = vadd.f32 0.0, %v477
  %v479 = vpop.f32.mrb[0].mxu0
  %v480 = vpop.f32.mrb[0].mxu0
  %v481 = vadd.f32 0.0, %v480
  %v482 = vpop.f32.mrb[0].mxu0
  %483 = vmatprep.mubr.bf16.mxu0 0
  %484 = vmatmul.mubr.bf16.gmra.mrb[0].mxu0 %v67
  %v485 = vpop.f32.mrb[0].mxu0
  %v486 = vadd.f32 0.0, %v485
  %v487 = vpop.f32.mrb[0].mxu0
  %v488 = vpop.f32.mrb[0].mxu0
  %v489 = vadd.f32 0.0, %v488
  %v490 = vpop.f32.mrb[0].mxu0
  %491 = vmatprep.mubr.bf16.mxu0 0
  %492 = vmatmul.mubr.bf16.gmra.mrb[0].mxu0 %v441
  %v493 = vpop.f32.mrb[0].mxu0
  %v494 = vadd.f32 0.0, %v493
  %v495 = vpop.f32.mrb[0].mxu0
  %v496 = vpop.f32.mrb[0].mxu0
  %v497 = vpop.f32.mrb[0].mxu0
  %498 = vdwg.mxu0
  %v499 = vpack.c.b16 %v44, %v44
  %v504 = vunpack.c.l.b16 %v419
  %v505 = vunpack.c.l.b16 %v420
  %v506 = vunpack.c.l.b16 %v421
  %v507 = vunpack.c.l.b16 %v422
  %v508 = vpack.c.b16 %v505, %v504
  %v509 = vpack.c.b16 %v507, %v506
  %v513 = vsel %vm62, %v499, 0
  %515 = vmatprep.subr.bf16.mxu0 0
  %516 = vmatpush1.bf16.msra.mxu0 %v508
  %517 = vmatprep.subr.bf16.mxu0 0
  %518 = vmatpush1.bf16.msra.mxu0 %v509
  %519 = vmatprep.subr.bf16.mxu0 0
  %520 = vmatpush1.bf16.msra.mxu0 0
  %521 = vmatprep.subr.bf16.mxu0 0
  %522 = vmatpush1.bf16.msra.mxu0 0
  %523 = vmatprep.subr.bf16.mxu0 0
  %524 = vmatpush1.bf16.msra.mxu0 0
  %525 = vmatprep.subr.bf16.mxu0 0
  %526 = vmatpush1.bf16.msra.mxu0 0
  %527 = vmatprep.subr.bf16.mxu0 0
  %528 = vmatpush1.bf16.msra.mxu0 0
  %529 = vmatprep.subr.bf16.mxu0 0
  %530 = vmatpush1.bf16.msra.mxu0 0
  %531 = vmatprep.subr.bf16.mxu0 0
  %532 = vmatpush1.bf16.msra.mxu0 0
  %533 = vmatprep.subr.bf16.mxu0 0
  %534 = vmatpush1.bf16.msra.mxu0 0
  %535 = vmatprep.subr.bf16.mxu0 0
  %536 = vmatpush1.bf16.msra.mxu0 0
  %537 = vmatprep.subr.bf16.mxu0 0
  %538 = vmatpush1.bf16.msra.mxu0 0
  %539 = vmatprep.subr.bf16.mxu0 0
  %540 = vmatpush1.bf16.msra.mxu0 0
  %541 = vmatprep.subr.bf16.mxu0 0
  %542 = vmatpush1.bf16.msra.mxu0 0
  %543 = vmatprep.subr.bf16.mxu0 0
  %544 = vmatpush1.bf16.msra.mxu0 0
  %545 = vmatprep.subr.bf16.mxu0 0
  %546 = vmatpush1.bf16.msra.mxu0 0
  %547 = vmatprep.mubr.bf16.mxu0 0
  %548 = vmatmul.mubr.bf16.gmra.mrb[0].mxu0 %v147
  %v549 = vpop.f32.mrb[0].mxu0
  %v550 = vadd.f32 %v478, %v549
  %v551 = vpop.f32.mrb[0].mxu0
  %v552 = vpop.f32.mrb[0].mxu0
  %v553 = vadd.f32 %v481, %v552
  %v554 = vpop.f32.mrb[0].mxu0
  %555 = vmatprep.mubr.bf16.mxu0 0
  %556 = vmatmul.mubr.bf16.gmra.mrb[0].mxu0 %v150
  %v557 = vpop.f32.mrb[0].mxu0
  %v558 = vadd.f32 %v486, %v557
  %v559 = vpop.f32.mrb[0].mxu0
  %v560 = vpop.f32.mrb[0].mxu0
  %v561 = vadd.f32 %v489, %v560
  %v562 = vpop.f32.mrb[0].mxu0
  %563 = vmatprep.mubr.bf16.mxu0 0
  %564 = vmatmul.mubr.bf16.gmra.mrb[0].mxu0 %v513
  %v565 = vpop.f32.mrb[0].mxu0
  %v566 = vadd.f32 %v494, %v565
  %v567 = vpop.f32.mrb[0].mxu0
  %v568 = vpop.f32.mrb[0].mxu0
  %v569 = vpop.f32.mrb[0].mxu0
  %570 = vdwg.mxu0
  %v571 = vld [vmem:[%s1 + $0x50] sm:$0xf]
  %v572 = vld [vmem:[%s1 + $0x54] sm:$0xf]
  %v573 = vld [vmem:[%s1 + $0x58] sm:$0xf]
  %v574 = vld [vmem:[%s1 + $0x5c] sm:$0xf]
  %v575 = vpack.c.b16 %v46, %v46
  %v580 = vunpack.c.l.b16 %v571
  %v581 = vunpack.c.l.b16 %v572
  %v582 = vunpack.c.l.b16 %v573
  %v583 = vunpack.c.l.b16 %v574
  %v584 = vpack.c.b16 %v581, %v580
  %v585 = vpack.c.b16 %v583, %v582
  %v589 = vsel %vm62, %v575, 0
  %591 = vmatprep.subr.bf16.mxu0 0
  %592 = vmatpush1.bf16.msra.mxu0 %v584
  %593 = vmatprep.subr.bf16.mxu0 0
  %594 = vmatpush1.bf16.msra.mxu0 %v585
  %595 = vmatprep.subr.bf16.mxu0 0
  %596 = vmatpush1.bf16.msra.mxu0 0
  %597 = vmatprep.subr.bf16.mxu0 0
  %598 = vmatpush1.bf16.msra.mxu0 0
  %599 = vmatprep.subr.bf16.mxu0 0
  %600 = vmatpush1.bf16.msra.mxu0 0
  %601 = vmatprep.subr.bf16.mxu0 0
  %602 = vmatpush1.bf16.msra.mxu0 0
  %603 = vmatprep.subr.bf16.mxu0 0
  %604 = vmatpush1.bf16.msra.mxu0 0
  %605 = vmatprep.subr.bf16.mxu0 0
  %606 = vmatpush1.bf16.msra.mxu0 0
  %607 = vmatprep.subr.bf16.mxu0 0
  %608 = vmatpush1.bf16.msra.mxu0 0
  %609 = vmatprep.subr.bf16.mxu0 0
  %610 = vmatpush1.bf16.msra.mxu0 0
  %611 = vmatprep.subr.bf16.mxu0 0
  %612 = vmatpush1.bf16.msra.mxu0 0
  %613 = vmatprep.subr.bf16.mxu0 0
  %614 = vmatpush1.bf16.msra.mxu0 0
  %615 = vmatprep.subr.bf16.mxu0 0
  %616 = vmatpush1.bf16.msra.mxu0 0
  %617 = vmatprep.subr.bf16.mxu0 0
  %618 = vmatpush1.bf16.msra.mxu0 0
  %619 = vmatprep.subr.bf16.mxu0 0
  %620 = vmatpush1.bf16.msra.mxu0 0
  %621 = vmatprep.subr.bf16.mxu0 0
  %622 = vmatpush1.bf16.msra.mxu0 0
  %623 = vmatprep.mubr.bf16.mxu0 0
  %624 = vmatmul.mubr.bf16.gmra.mrb[0].mxu0 %v150
  %v625 = vpop.f32.mrb[0].mxu0
  %v626 = vadd.f32 0.0, %v625
  %v627 = vpop.f32.mrb[0].mxu0
  %v628 = vpop.f32.mrb[0].mxu0
  %v629 = vadd.f32 0.0, %v628
  %v630 = vpop.f32.mrb[0].mxu0
  %631 = vmatprep.mubr.bf16.mxu0 0
  %632 = vmatmul.mubr.bf16.gmra.mrb[0].mxu0 %v153
  %v633 = vpop.f32.mrb[0].mxu0
  %v634 = vadd.f32 0.0, %v633
  %v635 = vpop.f32.mrb[0].mxu0
  %v636 = vpop.f32.mrb[0].mxu0
  %v637 = vadd.f32 0.0, %v636
  %v638 = vpop.f32.mrb[0].mxu0
  %639 = vmatprep.mubr.bf16.mxu0 0
  %640 = vmatmul.mubr.bf16.gmra.mrb[0].mxu0 %v589
  %v641 = vpop.f32.mrb[0].mxu0
  %v642 = vadd.f32 0.0, %v641
  %v643 = vpop.f32.mrb[0].mxu0
  %v644 = vpop.f32.mrb[0].mxu0
  %v645 = vpop.f32.mrb[0].mxu0
  %646 = vdwg.mxu0
  %v647 = vadd.f32 %v550, %v626
  %v648 = vadd.f32 %v553, %v629
  %v649 = vadd.f32 %v558, %v634
  %v650 = vadd.f32 %v561, %v637
  %v651 = vadd.f32 %v566, %v642
  %v652 = vld [vmem:[%s1 + $0x60] sm:$0xf]
  %v653 = vld [vmem:[%s1 + $0x64] sm:$0xf]
  %v654 = vld [vmem:[%s1 + $0x68] sm:$0xf]
  %v655 = vld [vmem:[%s1 + $0x6c] sm:$0xf]
  %v656 = vpack.c.b16 %v217, %v217
  %v661 = vunpack.c.l.b16 %v652
  %v662 = vunpack.c.l.b16 %v653
  %v663 = vunpack.c.l.b16 %v654
  %v664 = vunpack.c.l.b16 %v655
  %v665 = vpack.c.b16 %v662, %v661
  %v666 = vpack.c.b16 %v664, %v663
  %v670 = vsel %vm62, %v656, 0
  %672 = vmatprep.subr.bf16.mxu0 0
  %673 = vmatpush1.bf16.msra.mxu0 %v665
  %674 = vmatprep.subr.bf16.mxu0 0
  %675 = vmatpush1.bf16.msra.mxu0 %v666
  %676 = vmatprep.subr.bf16.mxu0 0
  %677 = vmatpush1.bf16.msra.mxu0 0
  %678 = vmatprep.subr.bf16.mxu0 0
  %679 = vmatpush1.bf16.msra.mxu0 0
  %680 = vmatprep.subr.bf16.mxu0 0
  %681 = vmatpush1.bf16.msra.mxu0 0
  %682 = vmatprep.subr.bf16.mxu0 0
  %683 = vmatpush1.bf16.msra.mxu0 0
  %684 = vmatprep.subr.bf16.mxu0 0
  %685 = vmatpush1.bf16.msra.mxu0 0
  %686 = vmatprep.subr.bf16.mxu0 0
  %687 = vmatpush1.bf16.msra.mxu0 0
  %688 = vmatprep.subr.bf16.mxu0 0
  %689 = vmatpush1.bf16.msra.mxu0 0
  %690 = vmatprep.subr.bf16.mxu0 0
  %691 = vmatpush1.bf16.msra.mxu0 0
  %692 = vmatprep.subr.bf16.mxu0 0
  %693 = vmatpush1.bf16.msra.mxu0 0
  %694 = vmatprep.subr.bf16.mxu0 0
  %695 = vmatpush1.bf16.msra.mxu0 0
  %696 = vmatprep.subr.bf16.mxu0 0
  %697 = vmatpush1.bf16.msra.mxu0 0
  %698 = vmatprep.subr.bf16.mxu0 0
  %699 = vmatpush1.bf16.msra.mxu0 0
  %700 = vmatprep.subr.bf16.mxu0 0
  %701 = vmatpush1.bf16.msra.mxu0 0
  %702 = vmatprep.subr.bf16.mxu0 0
  %703 = vmatpush1.bf16.msra.mxu0 0
  %704 = vmatprep.mubr.bf16.mxu0 0
  %705 = vmatmul.mubr.bf16.gmra.mrb[0].mxu0 %v67
  %v706 = vpop.f32.mrb[0].mxu0
  %v707 = vadd.f32 0.0, %v706
  %v708 = vpop.f32.mrb[0].mxu0
  %v709 = vpop.f32.mrb[0].mxu0
  %v710 = vadd.f32 0.0, %v709
  %v711 = vpop.f32.mrb[0].mxu0
  %712 = vmatprep.mubr.bf16.mxu0 0
  %713 = vmatmul.mubr.bf16.gmra.mrb[0].mxu0 %v70
  %v714 = vpop.f32.mrb[0].mxu0
  %v715 = vadd.f32 0.0, %v714
  %v716 = vpop.f32.mrb[0].mxu0
  %v717 = vpop.f32.mrb[0].mxu0
  %v718 = vadd.f32 0.0, %v717
  %v719 = vpop.f32.mrb[0].mxu0
  %720 = vmatprep.mubr.bf16.mxu0 0
  %721 = vmatmul.mubr.bf16.gmra.mrb[0].mxu0 %v670
  %v722 = vpop.f32.mrb[0].mxu0
  %v723 = vadd.f32 0.0, %v722
  %v724 = vpop.f32.mrb[0].mxu0
  %v725 = vpop.f32.mrb[0].mxu0
  %v726 = vpop.f32.mrb[0].mxu0
  %727 = vdwg.mxu0
  %v728 = vadd.f32 %v647, %v707
  %v729 = vadd.f32 %v648, %v710
  %v730 = vadd.f32 %v649, %v715
  %v731 = vadd.f32 %v650, %v718
  %v732 = vadd.f32 %v651, %v723
  %v733 = vmax.f32 %v728, %v729
  %v734 = vmax.f32 %v730, %v731
  %v735 = vmax.f32 %v733, %v734
  %v736 = vmax.f32 %v735, %v732
  %v737 = vld [vmem:[%s2 + $0x1] sm:$0x1]
  %v738 = vlaneseq
  %v739 = vshrl.u32 %v738, 7
  %v740 = vsub.s32 0, %v739
  %v741 = vrot.slane %v737, %v740
  %v742 = vadd.f32 %v736, %v741
  %v743 = vmax.f32 %v742, 0.0
  %v744 = vpack.c.bf16 %v743, %v743
  %v745 = vld [vmem:[%s3 + $0x40] sm:$0xf]
  %v746 = vld [vmem:[%s3 + $0x44] sm:$0xf]
  %v747 = vld [vmem:[%s3 + $0x48] sm:$0xf]
  %v748 = vld [vmem:[%s3 + $0x4c] sm:$0xf]
  %v749 = vld [vmem:[%s3 + $0x50] sm:$0xf]
  %v750 = vld [vmem:[%s3 + $0x54] sm:$0xf]
  %v751 = vld [vmem:[%s3 + $0x58] sm:$0xf]
  %v752 = vld [vmem:[%s3 + $0x5c] sm:$0xf]
  %v753 = vld [vmem:[%s3 + $0x60] sm:$0xf]
  %v754 = vld [vmem:[%s3 + $0x64] sm:$0xf]
  %v755 = vld [vmem:[%s3 + $0x68] sm:$0xf]
  %v756 = vld [vmem:[%s3 + $0x6c] sm:$0xf]
  %v757 = vld [vmem:[%s3 + $0x70] sm:$0xf]
  %v758 = vld [vmem:[%s3 + $0x74] sm:$0xf]
  %v759 = vld [vmem:[%s3 + $0x78] sm:$0xf]
  %v760 = vld [vmem:[%s3 + $0x7c] sm:$0xf]
  %v777 = vunpack.c.l.b16 %v745
  %v778 = vunpack.c.l.b16 %v746
  %v779 = vunpack.c.l.b16 %v747
  %v780 = vunpack.c.l.b16 %v748
  %v781 = vunpack.c.l.b16 %v749
  %v782 = vunpack.c.l.b16 %v750
  %v783 = vunpack.c.l.b16 %v751
  %v784 = vunpack.c.l.b16 %v752
  %v785 = vunpack.c.l.b16 %v753
  %v786 = vunpack.c.l.b16 %v754
  %v787 = vunpack.c.l.b16 %v755
  %v788 = vunpack.c.l.b16 %v756
  %v789 = vunpack.c.l.b16 %v757
  %v790 = vunpack.c.l.b16 %v758
  %v791 = vunpack.c.l.b16 %v759
  %v792 = vunpack.c.l.b16 %v760
  %v793 = vpack.c.b16 %v778, %v777
  %v794 = vpack.c.b16 %v780, %v779
  %v795 = vpack.c.b16 %v782, %v781
  %v796 = vpack.c.b16 %v784, %v783
  %v797 = vpack.c.b16 %v786, %v785
  %v798 = vpack.c.b16 %v788, %v787
  %v799 = vpack.c.b16 %v790, %v789
  %v800 = vpack.c.b16 %v792, %v791
  %809 = vmatprep.subr.bf16.mxu0 0
  %810 = vmatpush1.bf16.msra.mxu0 %v793
  %811 = vmatprep.subr.bf16.mxu0 0
  %812 = vmatpush1.bf16.msra.mxu0 %v794
  %813 = vmatprep.subr.bf16.mxu0 0
  %814 = vmatpush1.bf16.msra.mxu0 %v795
  %815 = vmatprep.subr.bf16.mxu0 0
  %816 = vmatpush1.bf16.msra.mxu0 %v796
  %817 = vmatprep.subr.bf16.mxu0 0
  %818 = vmatpush1.bf16.msra.mxu0 %v797
  %819 = vmatprep.subr.bf16.mxu0 0
  %820 = vmatpush1.bf16.msra.mxu0 %v798
  %821 = vmatprep.subr.bf16.mxu0 0
  %822 = vmatpush1.bf16.msra.mxu0 %v799
  %823 = vmatprep.subr.bf16.mxu0 0
  %824 = vmatpush1.bf16.msra.mxu0 %v800
  %825 = vmatprep.subr.bf16.mxu0 0
  %826 = vmatpush1.bf16.msra.mxu0 0
  %827 = vmatprep.subr.bf16.mxu0 0
  %828 = vmatpush1.bf16.msra.mxu0 0
  %829 = vmatprep.subr.bf16.mxu0 0
  %830 = vmatpush1.bf16.msra.mxu0 0
  %831 = vmatprep.subr.bf16.mxu0 0
  %832 = vmatpush1.bf16.msra.mxu0 0
  %833 = vmatprep.subr.bf16.mxu0 0
  %834 = vmatpush1.bf16.msra.mxu0 0
  %835 = vmatprep.subr.bf16.mxu0 0
  %836 = vmatpush1.bf16.msra.mxu0 0
  %837 = vmatprep.subr.bf16.mxu0 0
  %838 = vmatpush1.bf16.msra.mxu0 0
  %839 = vmatprep.subr.bf16.mxu0 0
  %840 = vmatpush1.bf16.msra.mxu0 0
  %841 = vmatprep.mubr.bf16.mxu0 0
  %842 = vmatmul.mubr.bf16.gmra.mrb[0].mxu0 %v744
  %v843 = vpop.f32.mrb[0].mxu0
  %v844 = vadd.f32 0.0, %v843
  %v845 = vpop.f32.mrb[0].mxu0
  %v846 = vpop.f32.mrb[0].mxu0
  %v847 = vpop.f32.mrb[0].mxu0
  %848 = vdwg.mxu0
  %v849 = vadd.f32 %v418, %v844
  %v850 = vld [vmem:[%s1 + $0x70] sm:$0xf]
  %v851 = vld [vmem:[%s1 + $0x74] sm:$0xf]
  %v852 = vld [vmem:[%s1 + $0x78] sm:$0xf]
  %v853 = vld [vmem:[%s1 + $0x7c] sm:$0xf]
  %v854 = vld [vmem:[%s1 + $0x80] sm:$0xf]
  %v855 = vld [vmem:[%s1 + $0x84] sm:$0xf]
  %v856 = vld [vmem:[%s1 + $0x88] sm:$0xf]
  %v857 = vld [vmem:[%s1 + $0x8c] sm:$0xf]
  %v862 = vunpack.c.l.b16 %v854
  %v863 = vunpack.c.l.b16 %v855
  %v864 = vunpack.c.l.b16 %v856
  %v865 = vunpack.c.l.b16 %v857
  %v866 = vpack.c.b16 %v863, %v862
  %v867 = vpack.c.b16 %v865, %v864
  %870 = vmatprep.subr.bf16.mxu0 0
  %871 = vmatpush1.bf16.msra.mxu0 %v866
  %872 = vmatprep.subr.bf16.mxu0 0
  %873 = vmatpush1.bf16.msra.mxu0 %v867
  %874 = vmatprep.subr.bf16.mxu0 0
  %875 = vmatpush1.bf16.msra.mxu0 0
  %876 = vmatprep.subr.bf16.mxu0 0
  %877 = vmatpush1.bf16.msra.mxu0 0
  %878 = vmatprep.subr.bf16.mxu0 0
  %879 = vmatpush1.bf16.msra.mxu0 0
  %880 = vmatprep.subr.bf16.mxu0 0
  %881 = vmatpush1.bf16.msra.mxu0 0
  %882 = vmatprep.subr.bf16.mxu0 0
  %883 = vmatpush1.bf16.msra.mxu0 0
  %884 = vmatprep.subr.bf16.mxu0 0
  %885 = vmatpush1.bf16.msra.mxu0 0
  %886 = vmatprep.subr.bf16.mxu0 0
  %887 = vmatpush1.bf16.msra.mxu0 0
  %888 = vmatprep.subr.bf16.mxu0 0
  %889 = vmatpush1.bf16.msra.mxu0 0
  %890 = vmatprep.subr.bf16.mxu0 0
  %891 = vmatpush1.bf16.msra.mxu0 0
  %892 = vmatprep.subr.bf16.mxu0 0
  %893 = vmatpush1.bf16.msra.mxu0 0
  %894 = vmatprep.subr.bf16.mxu0 0
  %895 = vmatpush1.bf16.msra.mxu0 0
  %896 = vmatprep.subr.bf16.mxu0 0
  %897 = vmatpush1.bf16.msra.mxu0 0
  %898 = vmatprep.subr.bf16.mxu0 0
  %899 = vmatpush1.bf16.msra.mxu0 0
  %900 = vmatprep.subr.bf16.mxu0 0
  %901 = vmatpush1.bf16.msra.mxu0 0
  %902 = vmatprep.mubr.bf16.mxu0 0
  %903 = vmatmul.mubr.bf16.gmra.mrb[0].mxu0 %v64
  %v904 = vpop.f32.mrb[0].mxu0
  %v905 = vadd.f32 0.0, %v904
  %v906 = vpop.f32.mrb[0].mxu0
  %v907 = vpop.f32.mrb[0].mxu0
  %v908 = vadd.f32 0.0, %v907
  %v909 = vpop.f32.mrb[0].mxu0
  %910 = vmatprep.mubr.bf16.mxu0 0
  %911 = vmatmul.mubr.bf16.gmra.mrb[0].mxu0 %v67
  %v912 = vpop.f32.mrb[0].mxu0
  %v913 = vadd.f32 0.0, %v912
  %v914 = vpop.f32.mrb[0].mxu0
  %v915 = vpop.f32.mrb[0].mxu0
  %v916 = vadd.f32 0.0, %v915
  %v917 = vpop.f32.mrb[0].mxu0
  %918 = vdwg.mxu0
  %v923 = vunpack.c.l.b16 %v850
  %v924 = vunpack.c.l.b16 %v851
  %v925 = vunpack.c.l.b16 %v852
  %v926 = vunpack.c.l.b16 %v853
  %v927 = vpack.c.b16 %v924, %v923
  %v928 = vpack.c.b16 %v926, %v925
  %931 = vmatprep.subr.bf16.mxu0 0
  %932 = vmatpush1.bf16.msra.mxu0 %v927
  %933 = vmatprep.subr.bf16.mxu0 0
  %934 = vmatpush1.bf16.msra.mxu0 %v928
  %935 = vmatprep.subr.bf16.mxu0 0
  %936 = vmatpush1.bf16.msra.mxu0 0
  %937 = vmatprep.subr.bf16.mxu0 0
  %938 = vmatpush1.bf16.msra.mxu0 0
  %939 = vmatprep.subr.bf16.mxu0 0
  %940 = vmatpush1.bf16.msra.mxu0 0
  %941 = vmatprep.subr.bf16.mxu0 0
  %942 = vmatpush1.bf16.msra.mxu0 0
  %943 = vmatprep.subr.bf16.mxu0 0
  %944 = vmatpush1.bf16.msra.mxu0 0
  %945 = vmatprep.subr.bf16.mxu0 0
  %946 = vmatpush1.bf16.msra.mxu0 0
  %947 = vmatprep.subr.bf16.mxu0 0
  %948 = vmatpush1.bf16.msra.mxu0 0
  %949 = vmatprep.subr.bf16.mxu0 0
  %950 = vmatpush1.bf16.msra.mxu0 0
  %951 = vmatprep.subr.bf16.mxu0 0
  %952 = vmatpush1.bf16.msra.mxu0 0
  %953 = vmatprep.subr.bf16.mxu0 0
  %954 = vmatpush1.bf16.msra.mxu0 0
  %955 = vmatprep.subr.bf16.mxu0 0
  %956 = vmatpush1.bf16.msra.mxu0 0
  %957 = vmatprep.subr.bf16.mxu0 0
  %958 = vmatpush1.bf16.msra.mxu0 0
  %959 = vmatprep.subr.bf16.mxu0 0
  %960 = vmatpush1.bf16.msra.mxu0 0
  %961 = vmatprep.subr.bf16.mxu0 0
  %962 = vmatpush1.bf16.msra.mxu0 0
  %963 = vmatprep.mubr.bf16.mxu0 0
  %964 = vmatmul.mubr.bf16.gmra.mrb[0].mxu0 %v147
  %v965 = vpop.f32.mrb[0].mxu0
  %v966 = vadd.f32 %v905, %v965
  %v967 = vpop.f32.mrb[0].mxu0
  %v968 = vpop.f32.mrb[0].mxu0
  %v969 = vadd.f32 %v908, %v968
  %v970 = vpop.f32.mrb[0].mxu0
  %971 = vmatprep.mubr.bf16.mxu0 0
  %972 = vmatmul.mubr.bf16.gmra.mrb[0].mxu0 %v150
  %v973 = vpop.f32.mrb[0].mxu0
  %v974 = vadd.f32 %v913, %v973
  %v975 = vpop.f32.mrb[0].mxu0
  %v976 = vpop.f32.mrb[0].mxu0
  %v977 = vadd.f32 %v916, %v976
  %v978 = vpop.f32.mrb[0].mxu0
  %979 = vdwg.mxu0
  %v980 = vld [vmem:[%s1 + $0x90] sm:$0xf]
  %v981 = vld [vmem:[%s1 + $0x94] sm:$0xf]
  %v982 = vld [vmem:[%s1 + $0x98] sm:$0xf]
  %v983 = vld [vmem:[%s1 + $0x9c] sm:$0xf]
  %v988 = vunpack.c.l.b16 %v980
  %v989 = vunpack.c.l.b16 %v981
  %v990 = vunpack.c.l.b16 %v982
  %v991 = vunpack.c.l.b16 %v983
  %v992 = vpack.c.b16 %v989, %v988
  %v993 = vpack.c.b16 %v991, %v990
  %996 = vmatprep.subr.bf16.mxu0 0
  %997 = vmatpush1.bf16.msra.mxu0 %v992
  %998 = vmatprep.subr.bf16.mxu0 0
  %999 = vmatpush1.bf16.msra.mxu0 %v993
  %1000 = vmatprep.subr.bf16.mxu0 0
  %1001 = vmatpush1.bf16.msra.mxu0 0
  %1002 = vmatprep.subr.bf16.mxu0 0
  %1003 = vmatpush1.bf16.msra.mxu0 0
  %1004 = vmatprep.subr.bf16.mxu0 0
  %1005 = vmatpush1.bf16.msra.mxu0 0
  %1006 = vmatprep.subr.bf16.mxu0 0
  %1007 = vmatpush1.bf16.msra.mxu0 0
  %1008 = vmatprep.subr.bf16.mxu0 0
  %1009 = vmatpush1.bf16.msra.mxu0 0
  %1010 = vmatprep.subr.bf16.mxu0 0
  %1011 = vmatpush1.bf16.msra.mxu0 0
  %1012 = vmatprep.subr.bf16.mxu0 0
  %1013 = vmatpush1.bf16.msra.mxu0 0
  %1014 = vmatprep.subr.bf16.mxu0 0
  %1015 = vmatpush1.bf16.msra.mxu0 0
  %1016 = vmatprep.subr.bf16.mxu0 0
  %1017 = vmatpush1.bf16.msra.mxu0 0
  %1018 = vmatprep.subr.bf16.mxu0 0
  %1019 = vmatpush1.bf16.msra.mxu0 0
  %1020 = vmatprep.subr.bf16.mxu0 0
  %1021 = vmatpush1.bf16.msra.mxu0 0
  %1022 = vmatprep.subr.bf16.mxu0 0
  %1023 = vmatpush1.bf16.msra.mxu0 0
  %1024 = vmatprep.subr.bf16.mxu0 0
  %1025 = vmatpush1.bf16.msra.mxu0 0
  %1026 = vmatprep.subr.bf16.mxu0 0
  %1027 = vmatpush1.bf16.msra.mxu0 0
  %1028 = vmatprep.mubr.bf16.mxu0 0
  %1029 = vmatmul.mubr.bf16.gmra.mrb[0].mxu0 %v150
  %v1030 = vpop.f32.mrb[0].mxu0
  %v1031 = vadd.f32 0.0, %v1030
  %v1032 = vpop.f32.mrb[0].mxu0
  %v1033 = vpop.f32.mrb[0].mxu0
  %v1034 = vadd.f32 0.0, %v1033
  %v1035 = vpop.f32.mrb[0].mxu0
  %1036 = vmatprep.mubr.bf16.mxu0 0
  %1037 = vmatmul.mubr.bf16.gmra.mrb[0].mxu0 %v153
  %v1038 = vpop.f32.mrb[0].mxu0
  %v1039 = vadd.f32 0.0, %v1038
  %v1040 = vpop.f32.mrb[0].mxu0
  %v1041 = vpop.f32.mrb[0].mxu0
  %v1042 = vadd.f32 0.0, %v1041
  %v1043 = vpop.f32.mrb[0].mxu0
  %1044 = vdwg.mxu0
  %v1045 = vadd.f32 %v966, %v1031
  %v1046 = vadd.f32 %v969, %v1034
  %v1047 = vadd.f32 %v974, %v1039
  %v1048 = vadd.f32 %v977, %v1042
  %v1049 = vld [vmem:[%s1 + $0xa0] sm:$0xf]
  %v1050 = vld [vmem:[%s1 + $0xa4] sm:$0xf]
  %v1051 = vld [vmem:[%s1 + $0xa8] sm:$0xf]
  %v1052 = vld [vmem:[%s1 + $0xac] sm:$0xf]
  %v1057 = vunpack.c.l.b16 %v1049
  %v1058 = vunpack.c.l.b16 %v1050
  %v1059 = vunpack.c.l.b16 %v1051
  %v1060 = vunpack.c.l.b16 %v1052
  %v1061 = vpack.c.b16 %v1058, %v1057
  %v1062 = vpack.c.b16 %v1060, %v1059
  %1065 = vmatprep.subr.bf16.mxu0 0
  %1066 = vmatpush1.bf16.msra.mxu0 %v1061
  %1067 = vmatprep.subr.bf16.mxu0 0
  %1068 = vmatpush1.bf16.msra.mxu0 %v1062
  %1069 = vmatprep.subr.bf16.mxu0 0
  %1070 = vmatpush1.bf16.msra.mxu0 0
  %1071 = vmatprep.subr.bf16.mxu0 0
  %1072 = vmatpush1.bf16.msra.mxu0 0
  %1073 = vmatprep.subr.bf16.mxu0 0
  %1074 = vmatpush1.bf16.msra.mxu0 0
  %1075 = vmatprep.subr.bf16.mxu0 0
  %1076 = vmatpush1.bf16.msra.mxu0 0
  %1077 = vmatprep.subr.bf16.mxu0 0
  %1078 = vmatpush1.bf16.msra.mxu0 0
  %1079 = vmatprep.subr.bf16.mxu0 0
  %1080 = vmatpush1.bf16.msra.mxu0 0
  %1081 = vmatprep.subr.bf16.mxu0 0
  %1082 = vmatpush1.bf16.msra.mxu0 0
  %1083 = vmatprep.subr.bf16.mxu0 0
  %1084 = vmatpush1.bf16.msra.mxu0 0
  %1085 = vmatprep.subr.bf16.mxu0 0
  %1086 = vmatpush1.bf16.msra.mxu0 0
  %1087 = vmatprep.subr.bf16.mxu0 0
  %1088 = vmatpush1.bf16.msra.mxu0 0
  %1089 = vmatprep.subr.bf16.mxu0 0
  %1090 = vmatpush1.bf16.msra.mxu0 0
  %1091 = vmatprep.subr.bf16.mxu0 0
  %1092 = vmatpush1.bf16.msra.mxu0 0
  %1093 = vmatprep.subr.bf16.mxu0 0
  %1094 = vmatpush1.bf16.msra.mxu0 0
  %1095 = vmatprep.subr.bf16.mxu0 0
  %1096 = vmatpush1.bf16.msra.mxu0 0
  %1097 = vmatprep.mubr.bf16.mxu0 0
  %1098 = vmatmul.mubr.bf16.gmra.mrb[0].mxu0 %v67
  %v1099 = vpop.f32.mrb[0].mxu0
  %v1100 = vadd.f32 0.0, %v1099
  %v1101 = vpop.f32.mrb[0].mxu0
  %v1102 = vpop.f32.mrb[0].mxu0
  %v1103 = vadd.f32 0.0, %v1102
  %v1104 = vpop.f32.mrb[0].mxu0
  %1105 = vmatprep.mubr.bf16.mxu0 0
  %1106 = vmatmul.mubr.bf16.gmra.mrb[0].mxu0 %v70
  %v1107 = vpop.f32.mrb[0].mxu0
  %v1108 = vadd.f32 0.0, %v1107
  %v1109 = vpop.f32.mrb[0].mxu0
  %v1110 = vpop.f32.mrb[0].mxu0
  %v1111 = vadd.f32 0.0, %v1110
  %v1112 = vpop.f32.mrb[0].mxu0
  %1113 = vdwg.mxu0
  %v1114 = vadd.f32 %v1045, %v1100
  %v1115 = vadd.f32 %v1046, %v1103
  %v1116 = vadd.f32 %v1047, %v1108
  %v1117 = vadd.f32 %v1048, %v1111
  %v1118 = vld [vmem:[%s1 + $0xb0] sm:$0xf]
  %v1119 = vld [vmem:[%s1 + $0xb4] sm:$0xf]
  %v1120 = vld [vmem:[%s1 + $0xb8] sm:$0xf]
  %v1121 = vld [vmem:[%s1 + $0xbc] sm:$0xf]
  %v1126 = vunpack.c.l.b16 %v1118
  %v1127 = vunpack.c.l.b16 %v1119
  %v1128 = vunpack.c.l.b16 %v1120
  %v1129 = vunpack.c.l.b16 %v1121
  %v1130 = vpack.c.b16 %v1127, %v1126
  %v1131 = vpack.c.b16 %v1129, %v1128
  %1134 = vmatprep.subr.bf16.mxu0 0
  %1135 = vmatpush1.bf16.msra.mxu0 %v1130
  %1136 = vmatprep.subr.bf16.mxu0 0
  %1137 = vmatpush1.bf16.msra.mxu0 %v1131
  %1138 = vmatprep.subr.bf16.mxu0 0
  %1139 = vmatpush1.bf16.msra.mxu0 0
  %1140 = vmatprep.subr.bf16.mxu0 0
  %1141 = vmatpush1.bf16.msra.mxu0 0
  %1142 = vmatprep.subr.bf16.mxu0 0
  %1143 = vmatpush1.bf16.msra.mxu0 0
  %1144 = vmatprep.subr.bf16.mxu0 0
  %1145 = vmatpush1.bf16.msra.mxu0 0
  %1146 = vmatprep.subr.bf16.mxu0 0
  %1147 = vmatpush1.bf16.msra.mxu0 0
  %1148 = vmatprep.subr.bf16.mxu0 0
  %1149 = vmatpush1.bf16.msra.mxu0 0
  %1150 = vmatprep.subr.bf16.mxu0 0
  %1151 = vmatpush1.bf16.msra.mxu0 0
  %1152 = vmatprep.subr.bf16.mxu0 0
  %1153 = vmatpush1.bf16.msra.mxu0 0
  %1154 = vmatprep.subr.bf16.mxu0 0
  %1155 = vmatpush1.bf16.msra.mxu0 0
  %1156 = vmatprep.subr.bf16.mxu0 0
  %1157 = vmatpush1.bf16.msra.mxu0 0
  %1158 = vmatprep.subr.bf16.mxu0 0
  %1159 = vmatpush1.bf16.msra.mxu0 0
  %1160 = vmatprep.subr.bf16.mxu0 0
  %1161 = vmatpush1.bf16.msra.mxu0 0
  %1162 = vmatprep.subr.bf16.mxu0 0
  %1163 = vmatpush1.bf16.msra.mxu0 0
  %1164 = vmatprep.subr.bf16.mxu0 0
  %1165 = vmatpush1.bf16.msra.mxu0 0
  %1166 = vmatprep.mubr.bf16.mxu0 0
  %1167 = vmatmul.mubr.bf16.gmra.mrb[0].mxu0 %v153
  %v1168 = vpop.f32.mrb[0].mxu0
  %v1169 = vadd.f32 0.0, %v1168
  %v1170 = vpop.f32.mrb[0].mxu0
  %v1171 = vpop.f32.mrb[0].mxu0
  %v1172 = vadd.f32 0.0, %v1171
  %v1173 = vpop.f32.mrb[0].mxu0
  %1174 = vmatprep.mubr.bf16.mxu0 0
  %1175 = vmatmul.mubr.bf16.gmra.mrb[0].mxu0 %v232
  %v1176 = vpop.f32.mrb[0].mxu0
  %v1177 = vadd.f32 0.0, %v1176
  %v1178 = vpop.f32.mrb[0].mxu0
  %v1179 = vpop.f32.mrb[0].mxu0
  %v1180 = vadd.f32 0.0, %v1179
  %v1181 = vpop.f32.mrb[0].mxu0
  %1182 = vdwg.mxu0
  %v1183 = vadd.f32 %v1114, %v1169
  %v1184 = vadd.f32 %v1115, %v1172
  %v1185 = vadd.f32 %v1116, %v1177
  %v1186 = vadd.f32 %v1117, %v1180
  %v1187 = vmax.f32 %v1183, %v1184
  %v1188 = vmax.f32 %v1185, %v1186
  %v1189 = vmax.f32 %v1187, %v1188
  %v1190 = vld [vmem:[%s2 + $0x2] sm:$0x1]
  %v1191 = vlaneseq
  %v1192 = vshrl.u32 %v1191, 7
  %v1193 = vsub.s32 0, %v1192
  %v1194 = vrot.slane %v1190, %v1193
  %v1195 = vadd.f32 %v1189, %v1194
  %v1196 = vmax.f32 %v1195, 0.0
  %v1197 = vpack.c.bf16 %v1196, %v1196
  %v1198 = vld [vmem:[%s3 + $0x80] sm:$0xf]
  %v1199 = vld [vmem:[%s3 + $0x84] sm:$0xf]
  %v1200 = vld [vmem:[%s3 + $0x88] sm:$0xf]
  %v1201 = vld [vmem:[%s3 + $0x8c] sm:$0xf]
  %v1202 = vld [vmem:[%s3 + $0x90] sm:$0xf]
  %v1203 = vld [vmem:[%s3 + $0x94] sm:$0xf]
  %v1204 = vld [vmem:[%s3 + $0x98] sm:$0xf]
  %v1205 = vld [vmem:[%s3 + $0x9c] sm:$0xf]
  %v1206 = vld [vmem:[%s3 + $0xa0] sm:$0xf]
  %v1207 = vld [vmem:[%s3 + $0xa4] sm:$0xf]
  %v1208 = vld [vmem:[%s3 + $0xa8] sm:$0xf]
  %v1209 = vld [vmem:[%s3 + $0xac] sm:$0xf]
  %v1210 = vld [vmem:[%s3 + $0xb0] sm:$0xf]
  %v1211 = vld [vmem:[%s3 + $0xb4] sm:$0xf]
  %v1212 = vld [vmem:[%s3 + $0xb8] sm:$0xf]
  %v1213 = vld [vmem:[%s3 + $0xbc] sm:$0xf]
  %v1230 = vunpack.c.l.b16 %v1198
  %v1231 = vunpack.c.l.b16 %v1199
  %v1232 = vunpack.c.l.b16 %v1200
  %v1233 = vunpack.c.l.b16 %v1201
  %v1234 = vunpack.c.l.b16 %v1202
  %v1235 = vunpack.c.l.b16 %v1203
  %v1236 = vunpack.c.l.b16 %v1204
  %v1237 = vunpack.c.l.b16 %v1205
  %v1238 = vunpack.c.l.b16 %v1206
  %v1239 = vunpack.c.l.b16 %v1207
  %v1240 = vunpack.c.l.b16 %v1208
  %v1241 = vunpack.c.l.b16 %v1209
  %v1242 = vunpack.c.l.b16 %v1210
  %v1243 = vunpack.c.l.b16 %v1211
  %v1244 = vunpack.c.l.b16 %v1212
  %v1245 = vunpack.c.l.b16 %v1213
  %v1246 = vpack.c.b16 %v1231, %v1230
  %v1247 = vpack.c.b16 %v1233, %v1232
  %v1248 = vpack.c.b16 %v1235, %v1234
  %v1249 = vpack.c.b16 %v1237, %v1236
  %v1250 = vpack.c.b16 %v1239, %v1238
  %v1251 = vpack.c.b16 %v1241, %v1240
  %v1252 = vpack.c.b16 %v1243, %v1242
  %v1253 = vpack.c.b16 %v1245, %v1244
  %1262 = vmatprep.subr.bf16.mxu0 0
  %1263 = vmatpush1.bf16.msra.mxu0 %v1246
  %1264 = vmatprep.subr.bf16.mxu0 0
  %1265 = vmatpush1.bf16.msra.mxu0 %v1247
  %1266 = vmatprep.subr.bf16.mxu0 0
  %1267 = vmatpush1.bf16.msra.mxu0 %v1248
  %1268 = vmatprep.subr.bf16.mxu0 0
  %1269 = vmatpush1.bf16.msra.mxu0 %v1249
  %1270 = vmatprep.subr.bf16.mxu0 0
  %1271 = vmatpush1.bf16.msra.mxu0 %v1250
  %1272 = vmatprep.subr.bf16.mxu0 0
  %1273 = vmatpush1.bf16.msra.mxu0 %v1251
  %1274 = vmatprep.subr.bf16.mxu0 0
  %1275 = vmatpush1.bf16.msra.mxu0 %v1252
  %1276 = vmatprep.subr.bf16.mxu0 0
  %1277 = vmatpush1.bf16.msra.mxu0 %v1253
  %1278 = vmatprep.subr.bf16.mxu0 0
  %1279 = vmatpush1.bf16.msra.mxu0 0
  %1280 = vmatprep.subr.bf16.mxu0 0
  %1281 = vmatpush1.bf16.msra.mxu0 0
  %1282 = vmatprep.subr.bf16.mxu0 0
  %1283 = vmatpush1.bf16.msra.mxu0 0
  %1284 = vmatprep.subr.bf16.mxu0 0
  %1285 = vmatpush1.bf16.msra.mxu0 0
  %1286 = vmatprep.subr.bf16.mxu0 0
  %1287 = vmatpush1.bf16.msra.mxu0 0
  %1288 = vmatprep.subr.bf16.mxu0 0
  %1289 = vmatpush1.bf16.msra.mxu0 0
  %1290 = vmatprep.subr.bf16.mxu0 0
  %1291 = vmatpush1.bf16.msra.mxu0 0
  %1292 = vmatprep.subr.bf16.mxu0 0
  %1293 = vmatpush1.bf16.msra.mxu0 0
  %1294 = vmatprep.mubr.bf16.mxu0 0
  %1295 = vmatmul.mubr.bf16.gmra.mrb[0].mxu0 %v1197
  %v1296 = vpop.f32.mrb[0].mxu0
  %v1297 = vadd.f32 0.0, %v1296
  %v1298 = vpop.f32.mrb[0].mxu0
  %v1299 = vpop.f32.mrb[0].mxu0
  %v1300 = vpop.f32.mrb[0].mxu0
  %1301 = vdwg.mxu0
  %v1302 = vadd.f32 %v849, %v1297
  %1303 = vst [vmem:[%s4] sm:$0xff] %v1302
  // Predicated region
  $region18: #{textcnn_forward.1} parent=0 // pred_check
    _
  $region19: #{textcnn_forward.1} parent=0 // pred_check_branch
    %1305 = sbr.rel (0) target = $region21
  $region20: #{textcnn_forward.1} parent=0 // pred_region
    _
  $region21: #{textcnn_forward.1} parent=0 // pred_fallthru
    _
  // Predicated region
  $region22: #{textcnn_forward.1} parent=0 // pred_check
    _
  $region23: #{textcnn_forward.1} parent=0 // pred_check_branch
    %1307 = sbr.rel (0) target = $region25
  $region24: #{textcnn_forward.1} parent=0 // pred_region
    _
  $region25: #{textcnn_forward.1} parent=0 // pred_fallthru
    _

</llo_original>
